<compile_context>
chip_gen: v7x
topology: tpu7x:2x2x1
jax: 0.10.0
libtpu: 0.0.40
codegen_flags: <defaults>
</compile_context>

<pallas_src>
import jax
import jax.numpy as jnp
from jax import lax
from jax.experimental import pallas as pl
from jax.experimental.pallas import tpu as pltpu


def _make_nlurnn_kernel(Tc, B, H):
    """Kernel over one time-chunk of Tc steps (inner fori_loop, unrolled)."""

    def kernel(x_ref, h0_ref, w_ih_ref, w_hh_ref, b_ih_ref, b_hh_ref,
               w_lin_ref, b_lin_ref, hn_ref, logits_ref, h_scratch, gx_scratch):
        i = pl.program_id(0)

        @pl.when(i == 0)
        def _():
            h_scratch[...] = h0_ref[...]

        # Hoisted input projection for the whole chunk: one big-M MXU matmul
        # (Tc*B, E) x (E, 3H) -> (Tc*B, 3H), f32 accumulation, + b_ih.
        # Stored in VMEM scratch so the recurrence only loads (B, 3H) per step.
        gx_scratch[...] = (
            jnp.dot(x_ref[...], w_ih_ref[...],
                    preferred_element_type=jnp.float32) + b_ih_ref[...])

        w_hh = w_hh_ref[...]          # (H, 3H) bf16
        b_hh = b_hh_ref[...]          # (1, 3H) f32

        def step(t, h):
            off = pl.multiple_of(t * B, B)
            gx = gx_scratch[pl.ds(off, B), :]                      # (B, 3H) f32
            # Single fused hidden->hidden gate matmul (B,H)x(H,3H).
            gh = jnp.dot(h.astype(w_hh.dtype), w_hh,
                         preferred_element_type=jnp.float32) + b_hh
            # PyTorch GRU gate equations (gate order r | z | n).
            r = jax.nn.sigmoid(gx[:, 0:H] + gh[:, 0:H])
            z = jax.nn.sigmoid(gx[:, H:2 * H] + gh[:, H:2 * H])
            n = jnp.tanh(gx[:, 2 * H:3 * H] + r * gh[:, 2 * H:3 * H])
            return (1.0 - z) * n + z * h

        h = lax.fori_loop(0, Tc, step, h_scratch[...], unroll=True)
        h_scratch[...] = h

        # Final hidden + fused output linear: written once, on the last chunk.
        @pl.when(i == pl.num_programs(0) - 1)
        def _():
            hn_ref[...] = h
            logits_ref[...] = (jnp.dot(h, w_lin_ref[...],
                                       preferred_element_type=jnp.float32)
                               + b_lin_ref[...])

    return kernel


def _pick_time_chunk(T, max_chunk=32):
    tc = min(T, max_chunk)
    while T % tc:
        tc -= 1
    return tc


def nlurnn_gru_head_pallas(x_flat, h0, w_ih, w_hh, b_ih, b_hh, w_lin, b_lin):
    """
    x_flat : [T*B, E]  bf16, time-major flattened embedded inputs
    h0     : [B, H]    f32
    w_ih   : [E, 3H]   bf16      w_hh : [H, 3H] bf16   (gate order r|z|n)
    b_ih   : [1, 3H]   f32       b_hh : [1, 3H] f32
    w_lin  : [H, A]    f32       b_lin: [1, A]  f32
    returns (h_n [B,H] f32, logits [B,A] f32)
    """
    B, H = h0.shape
    TB, E = x_flat.shape
    T = TB // B
    A = w_lin.shape[-1]
    Tc = _pick_time_chunk(T)
    n_chunks = T // Tc

    kernel = _make_nlurnn_kernel(Tc, B, H)

    hn, logits = pl.pallas_call(
        kernel,
        out_shape=(
            jax.ShapeDtypeStruct((B, H), jnp.float32),
            jax.ShapeDtypeStruct((B, A), jnp.float32),
        ),
        grid_spec=pltpu.PrefetchScalarGridSpec(
            num_scalar_prefetch=0,
            grid=(n_chunks,),
            in_specs=[
                pl.BlockSpec((Tc * B, E), lambda i: (i, 0)),    # x chunk
                pl.BlockSpec((B, H), lambda i: (0, 0)),         # h0
                pl.BlockSpec((E, 3 * H), lambda i: (0, 0)),     # w_ih
                pl.BlockSpec((H, 3 * H), lambda i: (0, 0)),     # w_hh
                pl.BlockSpec((1, 3 * H), lambda i: (0, 0)),     # b_ih
                pl.BlockSpec((1, 3 * H), lambda i: (0, 0)),     # b_hh
                pl.BlockSpec((H, A), lambda i: (0, 0)),         # w_lin
                pl.BlockSpec((1, A), lambda i: (0, 0)),         # b_lin
            ],
            out_specs=[
                pl.BlockSpec((B, H), lambda i: (0, 0)),         # h_n (resident)
                pl.BlockSpec((B, A), lambda i: (0, 0)),         # logits (resident)
            ],
            scratch_shapes=[
                pltpu.VMEM((B, H), jnp.float32),                # recurrent h
                pltpu.VMEM((Tc * B, 3 * H), jnp.float32),       # hoisted x@W_ih
            ],
        ),
        compiler_params=pltpu.CompilerParams(
            dimension_semantics=("arbitrary",),   # time recurrence is sequential
        ),
    )(x_flat, h0, w_ih, w_hh, b_ih, b_hh, w_lin, b_lin)
    return hn, logits


class NLURNNPallas:
    """JAX/Pallas port of the PyTorch NLURNN (n_layers=1, unidirectional)."""

    def __init__(self, dim_embedding, dim_hidden, attr_vocab_size, vocab_size,
                 n_layers=1, bidirectional=False, key=None):
        if attr_vocab_size and attr_vocab_size > dim_hidden:
            raise ValueError("attr_vocab_size should be no larger than dim_hidden")
        assert n_layers == 1 and not bidirectional, \
            "Pallas port implements the n_layers=1, unidirectional configuration"
        self.dim_embedding = dim_embedding
        self.dim_hidden = dim_hidden
        self.attr_vocab_size = attr_vocab_size
        self.vocab_size = vocab_size
        self.n_layers = n_layers
        self.n_directions = 1

        if key is None:
            key = jax.random.PRNGKey(0)
        k_emb, k_wih, k_whh, k_bih, k_bhh, k_wl, k_bl = jax.random.split(key, 7)

        H, E, A = dim_hidden, dim_embedding, attr_vocab_size
        bound = 1.0 / (H ** 0.5)

        self.embedding = jax.random.normal(k_emb, (vocab_size, E), jnp.float32)
        # GRU weights, gate order (r, z, n) concatenated on the output axis;
        # stored pre-transposed ([in, 3H]) and in bf16 for the MXU.
        self.w_ih = jax.random.uniform(
            k_wih, (E, 3 * H), jnp.float32, -bound, bound).astype(jnp.bfloat16)
        self.w_hh = jax.random.uniform(
            k_whh, (H, 3 * H), jnp.float32, -bound, bound).astype(jnp.bfloat16)
        self.b_ih = jax.random.uniform(k_bih, (1, 3 * H), jnp.float32, -bound, bound)
        self.b_hh = jax.random.uniform(k_bhh, (1, 3 * H), jnp.float32, -bound, bound)
        # Output linear (kept f32; tiny).
        lb = 1.0 / ((self.n_layers * self.n_directions * H) ** 0.5)
        self.w_lin = jax.random.uniform(k_wl, (H, A), jnp.float32, -lb, lb)
        self.b_lin = jax.random.uniform(k_bl, (1, A), jnp.float32, -lb, lb)

    # --- base-class helpers (parity with RNNModel) ------------------------
    def _init_hidden(self, inputs):
        batch_size = inputs.shape[0]
        return jnp.zeros(
            (self.n_layers * self.n_directions, batch_size, self.dim_hidden),
            jnp.float32)

    def _init_hidden_with_attrs(self, attrs):
        batch_size = attrs.shape[0]
        pad = jnp.zeros(
            (batch_size, self.dim_hidden - self.attr_vocab_size), attrs.dtype)
        hidden = jnp.concatenate([attrs, pad], axis=1)
        return jnp.broadcast_to(
            hidden[None, :, :],
            (self.n_layers * self.n_directions, batch_size, self.dim_hidden),
        ).astype(jnp.float32)

    # --- NLURNN.forward ----------------------------------------------------
    def forward(self, inputs, sample_size=1):
        """
        inputs: [B, T] int token ids, or [B, T, vocab_size] one-hot floats
        returns: logits [B, attr_vocab_size]
        """
        batch_size = inputs.shape[0]
        if inputs.ndim == 2:
            x = jnp.take(self.embedding, inputs, axis=0)               # [B,T,E]
        else:
            x = jnp.matmul(inputs.astype(jnp.float32), self.embedding)  # [B,T,E]
        T = x.shape[1]
        # time-major flatten; bf16 MXU operand (f32 accumulation in-kernel)
        x_flat = jnp.transpose(x, (1, 0, 2)).reshape(
            T * batch_size, self.dim_embedding).astype(jnp.bfloat16)
        h0 = jnp.zeros((batch_size, self.dim_hidden), jnp.float32)
        _, logits = nlurnn_gru_head_pallas(
            x_flat, h0, self.w_ih, self.w_hh, self.b_ih, self.b_hh,
            self.w_lin, self.b_lin)
        return logits


def _nlurnn_reference(x_flat_bf16, h0, w_ih, w_hh, b_ih, b_hh, w_lin, b_lin, B):
    """Pure-JAX reference (lax.scan) mirroring the kernel's bf16-MXU math."""
    TB, _ = x_flat_bf16.shape
    T = TB // B
    H = h0.shape[-1]
    gx_all = jnp.dot(x_flat_bf16, w_ih,
                     preferred_element_type=jnp.float32) + b_ih
    gx_all = gx_all.reshape(T, B, 3 * H)

    def step(h, gx):
        gh = jnp.dot(h.astype(w_hh.dtype), w_hh,
                     preferred_element_type=jnp.float32) + b_hh
        r = jax.nn.sigmoid(gx[:, 0:H] + gh[:, 0:H])
        z = jax.nn.sigmoid(gx[:, H:2 * H] + gh[:, H:2 * H])
        n = jnp.tanh(gx[:, 2 * H:3 * H] + r * gh[:, 2 * H:3 * H])
        h_new = (1.0 - z) * n + z * h
        return h_new, None

    h_last, _ = jax.lax.scan(step, h0, gx_all)
    logits = jnp.dot(h_last, w_lin, preferred_element_type=jnp.float32) + b_lin
    return h_last, logits


if __name__ == "__main__":
    batch = 8
    seq = 8
    dim_embedding = 32
    dim_hidden = 32
    attr_vocab_size = 16
    vocab_size = 64

    key = jax.random.PRNGKey(0)
    k_model, k_tok, k_oh = jax.random.split(key, 3)

    model = NLURNNPallas(dim_embedding, dim_hidden, attr_vocab_size,
                         vocab_size, key=k_model)

    # token-id path
    tokens = jax.random.randint(k_tok, (batch, seq), 0, vocab_size, jnp.int32)
    logits = model.forward(tokens)

    # one-hot path (one-hot over the full vocab, matmul'd with the embedding)
    oh_ids = jax.random.randint(k_oh, (batch, seq), 0, vocab_size, jnp.int32)
    onehot = jax.nn.one_hot(oh_ids, vocab_size, dtype=jnp.float32)
    logits_oh = model.forward(onehot)

    jax.block_until_ready((logits, logits_oh))

    # correctness check vs pure-JAX reference (token path)
    x = jnp.take(model.embedding, tokens, axis=0)
    x_flat = jnp.transpose(x, (1, 0, 2)).reshape(
        seq * batch, dim_embedding).astype(jnp.bfloat16)
    h0 = jnp.zeros((batch, dim_hidden), jnp.float32)
    hn_ref, logits_ref = _nlurnn_reference(
        x_flat, h0, model.w_ih, model.w_hh, model.b_ih, model.b_hh,
        model.w_lin, model.b_lin, batch)

    # correctness check vs pure-JAX reference (one-hot path)
    x2 = jnp.matmul(onehot, model.embedding)
    x2_flat = jnp.transpose(x2, (1, 0, 2)).reshape(
        seq * batch, dim_embedding).astype(jnp.bfloat16)
    _, logits_oh_ref = _nlurnn_reference(
        x2_flat, h0, model.w_ih, model.w_hh, model.b_ih, model.b_hh,
        model.w_lin, model.b_lin, batch)

    assert logits.shape == (batch, attr_vocab_size)
    assert logits_oh.shape == (batch, attr_vocab_size)
    assert jnp.allclose(logits, logits_ref, atol=1e-3, rtol=1e-3)
    assert jnp.allclose(logits_oh, logits_oh_ref, atol=1e-3, rtol=1e-3)

    print("KERNEL_OK")
</pallas_src>

<mosaic_0001>
module attributes {stable_mosaic.version = 11 : i64} {
  func.func @kernel(%arg0: i32, %arg1: memref<64x32xbf16, #tpu.memory_space<vmem>>, %arg2: memref<8x32xf32, #tpu.memory_space<vmem>>, %arg3: memref<32x96xbf16, #tpu.memory_space<vmem>>, %arg4: memref<32x96xbf16, #tpu.memory_space<vmem>>, %arg5: memref<1x96xf32, #tpu.memory_space<vmem>>, %arg6: memref<1x96xf32, #tpu.memory_space<vmem>>, %arg7: memref<32x16xf32, #tpu.memory_space<vmem>>, %arg8: memref<1x16xf32, #tpu.memory_space<vmem>>, %arg9: memref<8x32xf32, #tpu.memory_space<vmem>>, %arg10: memref<8x16xf32, #tpu.memory_space<vmem>>, %arg11: memref<8x32xf32, #tpu.memory_space<vmem>>, %arg12: memref<64x96xf32, #tpu.memory_space<vmem>>) attributes {dimension_semantics = [#tpu.dimension_semantics<arbitrary>], iteration_bounds = array<i64: 1>, scalar_prefetch = 0 : i64, scratch_operands = 2 : i64, tpu.core_type = #tpu.core_type<tc>, window_params = [{transform_indices = @transform_0, window_bounds = array<i64: 64, 32>}, {pipeline_mode = #tpu.pipeline_mode<synchronous>, transform_indices = @transform_1, window_bounds = array<i64: 8, 32>}, {pipeline_mode = #tpu.pipeline_mode<synchronous>, transform_indices = @transform_2, window_bounds = array<i64: 32, 96>}, {pipeline_mode = #tpu.pipeline_mode<synchronous>, transform_indices = @transform_3, window_bounds = array<i64: 32, 96>}, {pipeline_mode = #tpu.pipeline_mode<synchronous>, transform_indices = @transform_4, window_bounds = array<i64: 1, 96>}, {pipeline_mode = #tpu.pipeline_mode<synchronous>, transform_indices = @transform_5, window_bounds = array<i64: 1, 96>}, {pipeline_mode = #tpu.pipeline_mode<synchronous>, transform_indices = @transform_6, window_bounds = array<i64: 32, 16>}, {pipeline_mode = #tpu.pipeline_mode<synchronous>, transform_indices = @transform_7, window_bounds = array<i64: 1, 16>}, {pipeline_mode = #tpu.pipeline_mode<synchronous>, transform_indices = @transform_8, window_bounds = array<i64: 8, 32>}, {pipeline_mode = #tpu.pipeline_mode<synchronous>, transform_indices = @transform_9, window_bounds = array<i64: 8, 16>}]} {
    %c0_i32 = arith.constant 0 : i32
    %0 = arith.cmpi eq, %arg0, %c0_i32 : i32
    %1 = arith.extui %0 : i1 to i32
    %c0_i32_0 = arith.constant 0 : i32
    %2 = arith.cmpi ne, %1, %c0_i32_0 : i32
    scf.if %2 {
      %c0_67 = arith.constant 0 : index
      %c0_68 = arith.constant 0 : index
      %289 = vector.load %arg2[%c0_67, %c0_68] : memref<8x32xf32, #tpu.memory_space<vmem>>, vector<8x32xf32>
      %c0_69 = arith.constant 0 : index
      %c0_70 = arith.constant 0 : index
      %290 = vector.load %arg11[%c0_69, %c0_70] : memref<8x32xf32, #tpu.memory_space<vmem>>, vector<8x32xf32>
      tpu.vector_store %arg11[%c0_69, %c0_70], %289 {strides = array<i32>} : memref<8x32xf32, #tpu.memory_space<vmem>>, vector<8x32xf32>,
    } else {
    }
    %c0 = arith.constant 0 : index
    %c0_1 = arith.constant 0 : index
    %3 = vector.load %arg1[%c0, %c0_1] : memref<64x32xbf16, #tpu.memory_space<vmem>>, vector<64x32xbf16>
    %c0_2 = arith.constant 0 : index
    %c0_3 = arith.constant 0 : index
    %4 = vector.load %arg3[%c0_2, %c0_3] : memref<32x96xbf16, #tpu.memory_space<vmem>>, vector<32x96xbf16>
    %cst = arith.constant dense<0.000000e+00> : vector<64x96xf32>
    %5 = tpu.matmul %3, %4, %cst {dimension_numbers = #tpu.dot_dimension_numbers<[1], [0], [0], [1], [0, 0, 1, 1], [], []>} : vector<64x32xbf16>, vector<32x96xbf16>, vector<64x96xf32> -> vector<64x96xf32>
    %c0_4 = arith.constant 0 : index
    %c0_5 = arith.constant 0 : index
    %6 = vector.load %arg5[%c0_4, %c0_5] : memref<1x96xf32, #tpu.memory_space<vmem>>, vector<1x96xf32>
    %7 = vector.broadcast %6 : vector<1x96xf32> to vector<64x96xf32>
    %8 = arith.addf %5, %7 : vector<64x96xf32>
    %c0_6 = arith.constant 0 : index
    %c0_7 = arith.constant 0 : index
    %9 = vector.load %arg12[%c0_6, %c0_7] : memref<64x96xf32, #tpu.memory_space<vmem>>, vector<64x96xf32>
    tpu.vector_store %arg12[%c0_6, %c0_7], %8 {strides = array<i32>} : memref<64x96xf32, #tpu.memory_space<vmem>>, vector<64x96xf32>,
    %c0_8 = arith.constant 0 : index
    %c0_9 = arith.constant 0 : index
    %10 = vector.load %arg4[%c0_8, %c0_9] : memref<32x96xbf16, #tpu.memory_space<vmem>>, vector<32x96xbf16>
    %c0_10 = arith.constant 0 : index
    %c0_11 = arith.constant 0 : index
    %11 = vector.load %arg6[%c0_10, %c0_11] : memref<1x96xf32, #tpu.memory_space<vmem>>, vector<1x96xf32>
    %c0_12 = arith.constant 0 : index
    %c0_13 = arith.constant 0 : index
    %12 = vector.load %arg11[%c0_12, %c0_13] : memref<8x32xf32, #tpu.memory_space<vmem>>, vector<8x32xf32>
    %c0_i32_14 = arith.constant 0 : i32
    %c8_i32 = arith.constant 8 : i32
    %13 = arith.muli %c0_i32_14, %c8_i32 : i32
    %14 = tpu.assume_multiple %13, 8 : i32
    %15 = arith.index_cast %14 : i32 to index
    %c0_15 = arith.constant 0 : index
    %16 = vector.load %arg12[%15, %c0_15] : memref<64x96xf32, #tpu.memory_space<vmem>>, vector<8x96xf32>
    %17 = arith.truncf %12 : vector<8x32xf32> to vector<8x32xbf16>
    %cst_16 = arith.constant dense<0.000000e+00> : vector<8x96xf32>
    %18 = tpu.matmul %17, %10, %cst_16 {dimension_numbers = #tpu.dot_dimension_numbers<[1], [0], [0], [1], [0, 0, 1, 1], [], []>} : vector<8x32xbf16>, vector<32x96xbf16>, vector<8x96xf32> -> vector<8x96xf32>
    %19 = vector.broadcast %11 : vector<1x96xf32> to vector<8x96xf32>
    %20 = arith.addf %18, %19 : vector<8x96xf32>
    %21 = vector.extract_strided_slice %16 {offsets = [0, 0], sizes = [8, 32], strides = [1, 1]} : vector<8x96xf32> to vector<8x32xf32>
    %22 = vector.extract_strided_slice %20 {offsets = [0, 0], sizes = [8, 32], strides = [1, 1]} : vector<8x96xf32> to vector<8x32xf32>
    %23 = arith.addf %21, %22 : vector<8x32xf32>
    %24 = arith.negf %23 : vector<8x32xf32>
    %25 = math.exp %24 : vector<8x32xf32>
    %cst_17 = arith.constant 1.000000e+00 : f32
    %26 = vector.broadcast %cst_17 : f32 to vector<8x32xf32>
    %27 = arith.addf %26, %25 : vector<8x32xf32>
    %28 = arith.divf %26, %27 : vector<8x32xf32>
    %29 = vector.extract_strided_slice %16 {offsets = [0, 32], sizes = [8, 32], strides = [1, 1]} : vector<8x96xf32> to vector<8x32xf32>
    %30 = vector.extract_strided_slice %20 {offsets = [0, 32], sizes = [8, 32], strides = [1, 1]} : vector<8x96xf32> to vector<8x32xf32>
    %31 = arith.addf %29, %30 : vector<8x32xf32>
    %32 = arith.negf %31 : vector<8x32xf32>
    %33 = math.exp %32 : vector<8x32xf32>
    %cst_18 = arith.constant 1.000000e+00 : f32
    %34 = vector.broadcast %cst_18 : f32 to vector<8x32xf32>
    %35 = arith.addf %34, %33 : vector<8x32xf32>
    %36 = arith.divf %34, %35 : vector<8x32xf32>
    %37 = vector.extract_strided_slice %16 {offsets = [0, 64], sizes = [8, 32], strides = [1, 1]} : vector<8x96xf32> to vector<8x32xf32>
    %38 = vector.extract_strided_slice %20 {offsets = [0, 64], sizes = [8, 32], strides = [1, 1]} : vector<8x96xf32> to vector<8x32xf32>
    %39 = arith.mulf %28, %38 : vector<8x32xf32>
    %40 = arith.addf %37, %39 : vector<8x32xf32>
    %41 = math.tanh %40 : vector<8x32xf32>
    %cst_19 = arith.constant 1.000000e+00 : f32
    %42 = vector.broadcast %cst_19 : f32 to vector<8x32xf32>
    %43 = arith.subf %42, %36 : vector<8x32xf32>
    %44 = arith.mulf %43, %41 : vector<8x32xf32>
    %45 = arith.mulf %36, %12 : vector<8x32xf32>
    %46 = arith.addf %44, %45 : vector<8x32xf32>
    %c1_i32 = arith.constant 1 : i32
    %c8_i32_20 = arith.constant 8 : i32
    %47 = arith.muli %c1_i32, %c8_i32_20 : i32
    %48 = tpu.assume_multiple %47, 8 : i32
    %49 = arith.index_cast %48 : i32 to index
    %c0_21 = arith.constant 0 : index
    %50 = vector.load %arg12[%49, %c0_21] : memref<64x96xf32, #tpu.memory_space<vmem>>, vector<8x96xf32>
    %51 = arith.truncf %46 : vector<8x32xf32> to vector<8x32xbf16>
    %cst_22 = arith.constant dense<0.000000e+00> : vector<8x96xf32>
    %52 = tpu.matmul %51, %10, %cst_22 {dimension_numbers = #tpu.dot_dimension_numbers<[1], [0], [0], [1], [0, 0, 1, 1], [], []>} : vector<8x32xbf16>, vector<32x96xbf16>, vector<8x96xf32> -> vector<8x96xf32>
    %53 = vector.broadcast %11 : vector<1x96xf32> to vector<8x96xf32>
    %54 = arith.addf %52, %53 : vector<8x96xf32>
    %55 = vector.extract_strided_slice %50 {offsets = [0, 0], sizes = [8, 32], strides = [1, 1]} : vector<8x96xf32> to vector<8x32xf32>
    %56 = vector.extract_strided_slice %54 {offsets = [0, 0], sizes = [8, 32], strides = [1, 1]} : vector<8x96xf32> to vector<8x32xf32>
    %57 = arith.addf %55, %56 : vector<8x32xf32>
    %58 = arith.negf %57 : vector<8x32xf32>
    %59 = math.exp %58 : vector<8x32xf32>
    %cst_23 = arith.constant 1.000000e+00 : f32
    %60 = vector.broadcast %cst_23 : f32 to vector<8x32xf32>
    %61 = arith.addf %60, %59 : vector<8x32xf32>
    %62 = arith.divf %60, %61 : vector<8x32xf32>
    %63 = vector.extract_strided_slice %50 {offsets = [0, 32], sizes = [8, 32], strides = [1, 1]} : vector<8x96xf32> to vector<8x32xf32>
    %64 = vector.extract_strided_slice %54 {offsets = [0, 32], sizes = [8, 32], strides = [1, 1]} : vector<8x96xf32> to vector<8x32xf32>
    %65 = arith.addf %63, %64 : vector<8x32xf32>
    %66 = arith.negf %65 : vector<8x32xf32>
    %67 = math.exp %66 : vector<8x32xf32>
    %cst_24 = arith.constant 1.000000e+00 : f32
    %68 = vector.broadcast %cst_24 : f32 to vector<8x32xf32>
    %69 = arith.addf %68, %67 : vector<8x32xf32>
    %70 = arith.divf %68, %69 : vector<8x32xf32>
    %71 = vector.extract_strided_slice %50 {offsets = [0, 64], sizes = [8, 32], strides = [1, 1]} : vector<8x96xf32> to vector<8x32xf32>
    %72 = vector.extract_strided_slice %54 {offsets = [0, 64], sizes = [8, 32], strides = [1, 1]} : vector<8x96xf32> to vector<8x32xf32>
    %73 = arith.mulf %62, %72 : vector<8x32xf32>
    %74 = arith.addf %71, %73 : vector<8x32xf32>
    %75 = math.tanh %74 : vector<8x32xf32>
    %cst_25 = arith.constant 1.000000e+00 : f32
    %76 = vector.broadcast %cst_25 : f32 to vector<8x32xf32>
    %77 = arith.subf %76, %70 : vector<8x32xf32>
    %78 = arith.mulf %77, %75 : vector<8x32xf32>
    %79 = arith.mulf %70, %46 : vector<8x32xf32>
    %80 = arith.addf %78, %79 : vector<8x32xf32>
    %c2_i32 = arith.constant 2 : i32
    %c8_i32_26 = arith.constant 8 : i32
    %81 = arith.muli %c2_i32, %c8_i32_26 : i32
    %82 = tpu.assume_multiple %81, 8 : i32
    %83 = arith.index_cast %82 : i32 to index
    %c0_27 = arith.constant 0 : index
    %84 = vector.load %arg12[%83, %c0_27] : memref<64x96xf32, #tpu.memory_space<vmem>>, vector<8x96xf32>
    %85 = arith.truncf %80 : vector<8x32xf32> to vector<8x32xbf16>
    %cst_28 = arith.constant dense<0.000000e+00> : vector<8x96xf32>
    %86 = tpu.matmul %85, %10, %cst_28 {dimension_numbers = #tpu.dot_dimension_numbers<[1], [0], [0], [1], [0, 0, 1, 1], [], []>} : vector<8x32xbf16>, vector<32x96xbf16>, vector<8x96xf32> -> vector<8x96xf32>
    %87 = vector.broadcast %11 : vector<1x96xf32> to vector<8x96xf32>
    %88 = arith.addf %86, %87 : vector<8x96xf32>
    %89 = vector.extract_strided_slice %84 {offsets = [0, 0], sizes = [8, 32], strides = [1, 1]} : vector<8x96xf32> to vector<8x32xf32>
    %90 = vector.extract_strided_slice %88 {offsets = [0, 0], sizes = [8, 32], strides = [1, 1]} : vector<8x96xf32> to vector<8x32xf32>
    %91 = arith.addf %89, %90 : vector<8x32xf32>
    %92 = arith.negf %91 : vector<8x32xf32>
    %93 = math.exp %92 : vector<8x32xf32>
    %cst_29 = arith.constant 1.000000e+00 : f32
    %94 = vector.broadcast %cst_29 : f32 to vector<8x32xf32>
    %95 = arith.addf %94, %93 : vector<8x32xf32>
    %96 = arith.divf %94, %95 : vector<8x32xf32>
    %97 = vector.extract_strided_slice %84 {offsets = [0, 32], sizes = [8, 32], strides = [1, 1]} : vector<8x96xf32> to vector<8x32xf32>
    %98 = vector.extract_strided_slice %88 {offsets = [0, 32], sizes = [8, 32], strides = [1, 1]} : vector<8x96xf32> to vector<8x32xf32>
    %99 = arith.addf %97, %98 : vector<8x32xf32>
    %100 = arith.negf %99 : vector<8x32xf32>
    %101 = math.exp %100 : vector<8x32xf32>
    %cst_30 = arith.constant 1.000000e+00 : f32
    %102 = vector.broadcast %cst_30 : f32 to vector<8x32xf32>
    %103 = arith.addf %102, %101 : vector<8x32xf32>
    %104 = arith.divf %102, %103 : vector<8x32xf32>
    %105 = vector.extract_strided_slice %84 {offsets = [0, 64], sizes = [8, 32], strides = [1, 1]} : vector<8x96xf32> to vector<8x32xf32>
    %106 = vector.extract_strided_slice %88 {offsets = [0, 64], sizes = [8, 32], strides = [1, 1]} : vector<8x96xf32> to vector<8x32xf32>
    %107 = arith.mulf %96, %106 : vector<8x32xf32>
    %108 = arith.addf %105, %107 : vector<8x32xf32>
    %109 = math.tanh %108 : vector<8x32xf32>
    %cst_31 = arith.constant 1.000000e+00 : f32
    %110 = vector.broadcast %cst_31 : f32 to vector<8x32xf32>
    %111 = arith.subf %110, %104 : vector<8x32xf32>
    %112 = arith.mulf %111, %109 : vector<8x32xf32>
    %113 = arith.mulf %104, %80 : vector<8x32xf32>
    %114 = arith.addf %112, %113 : vector<8x32xf32>
    %c3_i32 = arith.constant 3 : i32
    %c8_i32_32 = arith.constant 8 : i32
    %115 = arith.muli %c3_i32, %c8_i32_32 : i32
    %116 = tpu.assume_multiple %115, 8 : i32
    %117 = arith.index_cast %116 : i32 to index
    %c0_33 = arith.constant 0 : index
    %118 = vector.load %arg12[%117, %c0_33] : memref<64x96xf32, #tpu.memory_space<vmem>>, vector<8x96xf32>
    %119 = arith.truncf %114 : vector<8x32xf32> to vector<8x32xbf16>
    %cst_34 = arith.constant dense<0.000000e+00> : vector<8x96xf32>
    %120 = tpu.matmul %119, %10, %cst_34 {dimension_numbers = #tpu.dot_dimension_numbers<[1], [0], [0], [1], [0, 0, 1, 1], [], []>} : vector<8x32xbf16>, vector<32x96xbf16>, vector<8x96xf32> -> vector<8x96xf32>
    %121 = vector.broadcast %11 : vector<1x96xf32> to vector<8x96xf32>
    %122 = arith.addf %120, %121 : vector<8x96xf32>
    %123 = vector.extract_strided_slice %118 {offsets = [0, 0], sizes = [8, 32], strides = [1, 1]} : vector<8x96xf32> to vector<8x32xf32>
    %124 = vector.extract_strided_slice %122 {offsets = [0, 0], sizes = [8, 32], strides = [1, 1]} : vector<8x96xf32> to vector<8x32xf32>
    %125 = arith.addf %123, %124 : vector<8x32xf32>
    %126 = arith.negf %125 : vector<8x32xf32>
    %127 = math.exp %126 : vector<8x32xf32>
    %cst_35 = arith.constant 1.000000e+00 : f32
    %128 = vector.broadcast %cst_35 : f32 to vector<8x32xf32>
    %129 = arith.addf %128, %127 : vector<8x32xf32>
    %130 = arith.divf %128, %129 : vector<8x32xf32>
    %131 = vector.extract_strided_slice %118 {offsets = [0, 32], sizes = [8, 32], strides = [1, 1]} : vector<8x96xf32> to vector<8x32xf32>
    %132 = vector.extract_strided_slice %122 {offsets = [0, 32], sizes = [8, 32], strides = [1, 1]} : vector<8x96xf32> to vector<8x32xf32>
    %133 = arith.addf %131, %132 : vector<8x32xf32>
    %134 = arith.negf %133 : vector<8x32xf32>
    %135 = math.exp %134 : vector<8x32xf32>
    %cst_36 = arith.constant 1.000000e+00 : f32
    %136 = vector.broadcast %cst_36 : f32 to vector<8x32xf32>
    %137 = arith.addf %136, %135 : vector<8x32xf32>
    %138 = arith.divf %136, %137 : vector<8x32xf32>
    %139 = vector.extract_strided_slice %118 {offsets = [0, 64], sizes = [8, 32], strides = [1, 1]} : vector<8x96xf32> to vector<8x32xf32>
    %140 = vector.extract_strided_slice %122 {offsets = [0, 64], sizes = [8, 32], strides = [1, 1]} : vector<8x96xf32> to vector<8x32xf32>
    %141 = arith.mulf %130, %140 : vector<8x32xf32>
    %142 = arith.addf %139, %141 : vector<8x32xf32>
    %143 = math.tanh %142 : vector<8x32xf32>
    %cst_37 = arith.constant 1.000000e+00 : f32
    %144 = vector.broadcast %cst_37 : f32 to vector<8x32xf32>
    %145 = arith.subf %144, %138 : vector<8x32xf32>
    %146 = arith.mulf %145, %143 : vector<8x32xf32>
    %147 = arith.mulf %138, %114 : vector<8x32xf32>
    %148 = arith.addf %146, %147 : vector<8x32xf32>
    %c4_i32 = arith.constant 4 : i32
    %c8_i32_38 = arith.constant 8 : i32
    %149 = arith.muli %c4_i32, %c8_i32_38 : i32
    %150 = tpu.assume_multiple %149, 8 : i32
    %151 = arith.index_cast %150 : i32 to index
    %c0_39 = arith.constant 0 : index
    %152 = vector.load %arg12[%151, %c0_39] : memref<64x96xf32, #tpu.memory_space<vmem>>, vector<8x96xf32>
    %153 = arith.truncf %148 : vector<8x32xf32> to vector<8x32xbf16>
    %cst_40 = arith.constant dense<0.000000e+00> : vector<8x96xf32>
    %154 = tpu.matmul %153, %10, %cst_40 {dimension_numbers = #tpu.dot_dimension_numbers<[1], [0], [0], [1], [0, 0, 1, 1], [], []>} : vector<8x32xbf16>, vector<32x96xbf16>, vector<8x96xf32> -> vector<8x96xf32>
    %155 = vector.broadcast %11 : vector<1x96xf32> to vector<8x96xf32>
    %156 = arith.addf %154, %155 : vector<8x96xf32>
    %157 = vector.extract_strided_slice %152 {offsets = [0, 0], sizes = [8, 32], strides = [1, 1]} : vector<8x96xf32> to vector<8x32xf32>
    %158 = vector.extract_strided_slice %156 {offsets = [0, 0], sizes = [8, 32], strides = [1, 1]} : vector<8x96xf32> to vector<8x32xf32>
    %159 = arith.addf %157, %158 : vector<8x32xf32>
    %160 = arith.negf %159 : vector<8x32xf32>
    %161 = math.exp %160 : vector<8x32xf32>
    %cst_41 = arith.constant 1.000000e+00 : f32
    %162 = vector.broadcast %cst_41 : f32 to vector<8x32xf32>
    %163 = arith.addf %162, %161 : vector<8x32xf32>
    %164 = arith.divf %162, %163 : vector<8x32xf32>
    %165 = vector.extract_strided_slice %152 {offsets = [0, 32], sizes = [8, 32], strides = [1, 1]} : vector<8x96xf32> to vector<8x32xf32>
    %166 = vector.extract_strided_slice %156 {offsets = [0, 32], sizes = [8, 32], strides = [1, 1]} : vector<8x96xf32> to vector<8x32xf32>
    %167 = arith.addf %165, %166 : vector<8x32xf32>
    %168 = arith.negf %167 : vector<8x32xf32>
    %169 = math.exp %168 : vector<8x32xf32>
    %cst_42 = arith.constant 1.000000e+00 : f32
    %170 = vector.broadcast %cst_42 : f32 to vector<8x32xf32>
    %171 = arith.addf %170, %169 : vector<8x32xf32>
    %172 = arith.divf %170, %171 : vector<8x32xf32>
    %173 = vector.extract_strided_slice %152 {offsets = [0, 64], sizes = [8, 32], strides = [1, 1]} : vector<8x96xf32> to vector<8x32xf32>
    %174 = vector.extract_strided_slice %156 {offsets = [0, 64], sizes = [8, 32], strides = [1, 1]} : vector<8x96xf32> to vector<8x32xf32>
    %175 = arith.mulf %164, %174 : vector<8x32xf32>
    %176 = arith.addf %173, %175 : vector<8x32xf32>
    %177 = math.tanh %176 : vector<8x32xf32>
    %cst_43 = arith.constant 1.000000e+00 : f32
    %178 = vector.broadcast %cst_43 : f32 to vector<8x32xf32>
    %179 = arith.subf %178, %172 : vector<8x32xf32>
    %180 = arith.mulf %179, %177 : vector<8x32xf32>
    %181 = arith.mulf %172, %148 : vector<8x32xf32>
    %182 = arith.addf %180, %181 : vector<8x32xf32>
    %c5_i32 = arith.constant 5 : i32
    %c8_i32_44 = arith.constant 8 : i32
    %183 = arith.muli %c5_i32, %c8_i32_44 : i32
    %184 = tpu.assume_multiple %183, 8 : i32
    %185 = arith.index_cast %184 : i32 to index
    %c0_45 = arith.constant 0 : index
    %186 = vector.load %arg12[%185, %c0_45] : memref<64x96xf32, #tpu.memory_space<vmem>>, vector<8x96xf32>
    %187 = arith.truncf %182 : vector<8x32xf32> to vector<8x32xbf16>
    %cst_46 = arith.constant dense<0.000000e+00> : vector<8x96xf32>
    %188 = tpu.matmul %187, %10, %cst_46 {dimension_numbers = #tpu.dot_dimension_numbers<[1], [0], [0], [1], [0, 0, 1, 1], [], []>} : vector<8x32xbf16>, vector<32x96xbf16>, vector<8x96xf32> -> vector<8x96xf32>
    %189 = vector.broadcast %11 : vector<1x96xf32> to vector<8x96xf32>
    %190 = arith.addf %188, %189 : vector<8x96xf32>
    %191 = vector.extract_strided_slice %186 {offsets = [0, 0], sizes = [8, 32], strides = [1, 1]} : vector<8x96xf32> to vector<8x32xf32>
    %192 = vector.extract_strided_slice %190 {offsets = [0, 0], sizes = [8, 32], strides = [1, 1]} : vector<8x96xf32> to vector<8x32xf32>
    %193 = arith.addf %191, %192 : vector<8x32xf32>
    %194 = arith.negf %193 : vector<8x32xf32>
    %195 = math.exp %194 : vector<8x32xf32>
    %cst_47 = arith.constant 1.000000e+00 : f32
    %196 = vector.broadcast %cst_47 : f32 to vector<8x32xf32>
    %197 = arith.addf %196, %195 : vector<8x32xf32>
    %198 = arith.divf %196, %197 : vector<8x32xf32>
    %199 = vector.extract_strided_slice %186 {offsets = [0, 32], sizes = [8, 32], strides = [1, 1]} : vector<8x96xf32> to vector<8x32xf32>
    %200 = vector.extract_strided_slice %190 {offsets = [0, 32], sizes = [8, 32], strides = [1, 1]} : vector<8x96xf32> to vector<8x32xf32>
    %201 = arith.addf %199, %200 : vector<8x32xf32>
    %202 = arith.negf %201 : vector<8x32xf32>
    %203 = math.exp %202 : vector<8x32xf32>
    %cst_48 = arith.constant 1.000000e+00 : f32
    %204 = vector.broadcast %cst_48 : f32 to vector<8x32xf32>
    %205 = arith.addf %204, %203 : vector<8x32xf32>
    %206 = arith.divf %204, %205 : vector<8x32xf32>
    %207 = vector.extract_strided_slice %186 {offsets = [0, 64], sizes = [8, 32], strides = [1, 1]} : vector<8x96xf32> to vector<8x32xf32>
    %208 = vector.extract_strided_slice %190 {offsets = [0, 64], sizes = [8, 32], strides = [1, 1]} : vector<8x96xf32> to vector<8x32xf32>
    %209 = arith.mulf %198, %208 : vector<8x32xf32>
    %210 = arith.addf %207, %209 : vector<8x32xf32>
    %211 = math.tanh %210 : vector<8x32xf32>
    %cst_49 = arith.constant 1.000000e+00 : f32
    %212 = vector.broadcast %cst_49 : f32 to vector<8x32xf32>
    %213 = arith.subf %212, %206 : vector<8x32xf32>
    %214 = arith.mulf %213, %211 : vector<8x32xf32>
    %215 = arith.mulf %206, %182 : vector<8x32xf32>
    %216 = arith.addf %214, %215 : vector<8x32xf32>
    %c6_i32 = arith.constant 6 : i32
    %c8_i32_50 = arith.constant 8 : i32
    %217 = arith.muli %c6_i32, %c8_i32_50 : i32
    %218 = tpu.assume_multiple %217, 8 : i32
    %219 = arith.index_cast %218 : i32 to index
    %c0_51 = arith.constant 0 : index
    %220 = vector.load %arg12[%219, %c0_51] : memref<64x96xf32, #tpu.memory_space<vmem>>, vector<8x96xf32>
    %221 = arith.truncf %216 : vector<8x32xf32> to vector<8x32xbf16>
    %cst_52 = arith.constant dense<0.000000e+00> : vector<8x96xf32>
    %222 = tpu.matmul %221, %10, %cst_52 {dimension_numbers = #tpu.dot_dimension_numbers<[1], [0], [0], [1], [0, 0, 1, 1], [], []>} : vector<8x32xbf16>, vector<32x96xbf16>, vector<8x96xf32> -> vector<8x96xf32>
    %223 = vector.broadcast %11 : vector<1x96xf32> to vector<8x96xf32>
    %224 = arith.addf %222, %223 : vector<8x96xf32>
    %225 = vector.extract_strided_slice %220 {offsets = [0, 0], sizes = [8, 32], strides = [1, 1]} : vector<8x96xf32> to vector<8x32xf32>
    %226 = vector.extract_strided_slice %224 {offsets = [0, 0], sizes = [8, 32], strides = [1, 1]} : vector<8x96xf32> to vector<8x32xf32>
    %227 = arith.addf %225, %226 : vector<8x32xf32>
    %228 = arith.negf %227 : vector<8x32xf32>
    %229 = math.exp %228 : vector<8x32xf32>
    %cst_53 = arith.constant 1.000000e+00 : f32
    %230 = vector.broadcast %cst_53 : f32 to vector<8x32xf32>
    %231 = arith.addf %230, %229 : vector<8x32xf32>
    %232 = arith.divf %230, %231 : vector<8x32xf32>
    %233 = vector.extract_strided_slice %220 {offsets = [0, 32], sizes = [8, 32], strides = [1, 1]} : vector<8x96xf32> to vector<8x32xf32>
    %234 = vector.extract_strided_slice %224 {offsets = [0, 32], sizes = [8, 32], strides = [1, 1]} : vector<8x96xf32> to vector<8x32xf32>
    %235 = arith.addf %233, %234 : vector<8x32xf32>
    %236 = arith.negf %235 : vector<8x32xf32>
    %237 = math.exp %236 : vector<8x32xf32>
    %cst_54 = arith.constant 1.000000e+00 : f32
    %238 = vector.broadcast %cst_54 : f32 to vector<8x32xf32>
    %239 = arith.addf %238, %237 : vector<8x32xf32>
    %240 = arith.divf %238, %239 : vector<8x32xf32>
    %241 = vector.extract_strided_slice %220 {offsets = [0, 64], sizes = [8, 32], strides = [1, 1]} : vector<8x96xf32> to vector<8x32xf32>
    %242 = vector.extract_strided_slice %224 {offsets = [0, 64], sizes = [8, 32], strides = [1, 1]} : vector<8x96xf32> to vector<8x32xf32>
    %243 = arith.mulf %232, %242 : vector<8x32xf32>
    %244 = arith.addf %241, %243 : vector<8x32xf32>
    %245 = math.tanh %244 : vector<8x32xf32>
    %cst_55 = arith.constant 1.000000e+00 : f32
    %246 = vector.broadcast %cst_55 : f32 to vector<8x32xf32>
    %247 = arith.subf %246, %240 : vector<8x32xf32>
    %248 = arith.mulf %247, %245 : vector<8x32xf32>
    %249 = arith.mulf %240, %216 : vector<8x32xf32>
    %250 = arith.addf %248, %249 : vector<8x32xf32>
    %c7_i32 = arith.constant 7 : i32
    %c8_i32_56 = arith.constant 8 : i32
    %251 = arith.muli %c7_i32, %c8_i32_56 : i32
    %252 = tpu.assume_multiple %251, 8 : i32
    %253 = arith.index_cast %252 : i32 to index
    %c0_57 = arith.constant 0 : index
    %254 = vector.load %arg12[%253, %c0_57] : memref<64x96xf32, #tpu.memory_space<vmem>>, vector<8x96xf32>
    %255 = arith.truncf %250 : vector<8x32xf32> to vector<8x32xbf16>
    %cst_58 = arith.constant dense<0.000000e+00> : vector<8x96xf32>
    %256 = tpu.matmul %255, %10, %cst_58 {dimension_numbers = #tpu.dot_dimension_numbers<[1], [0], [0], [1], [0, 0, 1, 1], [], []>} : vector<8x32xbf16>, vector<32x96xbf16>, vector<8x96xf32> -> vector<8x96xf32>
    %257 = vector.broadcast %11 : vector<1x96xf32> to vector<8x96xf32>
    %258 = arith.addf %256, %257 : vector<8x96xf32>
    %259 = vector.extract_strided_slice %254 {offsets = [0, 0], sizes = [8, 32], strides = [1, 1]} : vector<8x96xf32> to vector<8x32xf32>
    %260 = vector.extract_strided_slice %258 {offsets = [0, 0], sizes = [8, 32], strides = [1, 1]} : vector<8x96xf32> to vector<8x32xf32>
    %261 = arith.addf %259, %260 : vector<8x32xf32>
    %262 = arith.negf %261 : vector<8x32xf32>
    %263 = math.exp %262 : vector<8x32xf32>
    %cst_59 = arith.constant 1.000000e+00 : f32
    %264 = vector.broadcast %cst_59 : f32 to vector<8x32xf32>
    %265 = arith.addf %264, %263 : vector<8x32xf32>
    %266 = arith.divf %264, %265 : vector<8x32xf32>
    %267 = vector.extract_strided_slice %254 {offsets = [0, 32], sizes = [8, 32], strides = [1, 1]} : vector<8x96xf32> to vector<8x32xf32>
    %268 = vector.extract_strided_slice %258 {offsets = [0, 32], sizes = [8, 32], strides = [1, 1]} : vector<8x96xf32> to vector<8x32xf32>
    %269 = arith.addf %267, %268 : vector<8x32xf32>
    %270 = arith.negf %269 : vector<8x32xf32>
    %271 = math.exp %270 : vector<8x32xf32>
    %cst_60 = arith.constant 1.000000e+00 : f32
    %272 = vector.broadcast %cst_60 : f32 to vector<8x32xf32>
    %273 = arith.addf %272, %271 : vector<8x32xf32>
    %274 = arith.divf %272, %273 : vector<8x32xf32>
    %275 = vector.extract_strided_slice %254 {offsets = [0, 64], sizes = [8, 32], strides = [1, 1]} : vector<8x96xf32> to vector<8x32xf32>
    %276 = vector.extract_strided_slice %258 {offsets = [0, 64], sizes = [8, 32], strides = [1, 1]} : vector<8x96xf32> to vector<8x32xf32>
    %277 = arith.mulf %266, %276 : vector<8x32xf32>
    %278 = arith.addf %275, %277 : vector<8x32xf32>
    %279 = math.tanh %278 : vector<8x32xf32>
    %cst_61 = arith.constant 1.000000e+00 : f32
    %280 = vector.broadcast %cst_61 : f32 to vector<8x32xf32>
    %281 = arith.subf %280, %274 : vector<8x32xf32>
    %282 = arith.mulf %281, %279 : vector<8x32xf32>
    %283 = arith.mulf %274, %250 : vector<8x32xf32>
    %284 = arith.addf %282, %283 : vector<8x32xf32>
    %c8_i32_62 = arith.constant 8 : i32
    %c0_63 = arith.constant 0 : index
    %c0_64 = arith.constant 0 : index
    %285 = vector.load %arg11[%c0_63, %c0_64] : memref<8x32xf32, #tpu.memory_space<vmem>>, vector<8x32xf32>
    tpu.vector_store %arg11[%c0_63, %c0_64], %284 {strides = array<i32>} : memref<8x32xf32, #tpu.memory_space<vmem>>, vector<8x32xf32>,
    %c0_i32_65 = arith.constant 0 : i32
    %286 = arith.cmpi eq, %arg0, %c0_i32_65 : i32
    %287 = arith.extui %286 : i1 to i32
    %c0_i32_66 = arith.constant 0 : i32
    %288 = arith.cmpi ne, %287, %c0_i32_66 : i32
    scf.if %288 {
      %c0_67 = arith.constant 0 : index
      %c0_68 = arith.constant 0 : index
      %289 = vector.load %arg9[%c0_67, %c0_68] : memref<8x32xf32, #tpu.memory_space<vmem>>, vector<8x32xf32>
      tpu.vector_store %arg9[%c0_67, %c0_68], %284 {strides = array<i32>} : memref<8x32xf32, #tpu.memory_space<vmem>>, vector<8x32xf32>,
      %c0_69 = arith.constant 0 : index
      %c0_70 = arith.constant 0 : index
      %290 = vector.load %arg7[%c0_69, %c0_70] : memref<32x16xf32, #tpu.memory_space<vmem>>, vector<32x16xf32>
      %cst_71 = arith.constant dense<0.000000e+00> : vector<8x16xf32>
      %291 = tpu.matmul %284, %290, %cst_71 {dimension_numbers = #tpu.dot_dimension_numbers<[1], [0], [0], [1], [0, 0, 1, 1], [], []>} : vector<8x32xf32>, vector<32x16xf32>, vector<8x16xf32> -> vector<8x16xf32>
      %c0_72 = arith.constant 0 : index
      %c0_73 = arith.constant 0 : index
      %292 = vector.load %arg8[%c0_72, %c0_73] : memref<1x16xf32, #tpu.memory_space<vmem>>, vector<1x16xf32>
      %293 = vector.broadcast %292 : vector<1x16xf32> to vector<8x16xf32>
      %294 = arith.addf %291, %293 : vector<8x16xf32>
      %c0_74 = arith.constant 0 : index
      %c0_75 = arith.constant 0 : index
      %295 = vector.load %arg10[%c0_74, %c0_75] : memref<8x16xf32, #tpu.memory_space<vmem>>, vector<8x16xf32>
      tpu.vector_store %arg10[%c0_74, %c0_75], %294 {strides = array<i32>} : memref<8x16xf32, #tpu.memory_space<vmem>>, vector<8x16xf32>,
    } else {
    }
    return
  }
  func.func @transform_0(%arg0: i32) -> (i32, i32) {
    %c0_i32 = arith.constant 0 : i32
    %c0_i32_0 = arith.constant 0 : i32
    return %arg0, %c0_i32 : i32, i32
  }
  func.func @transform_1(%arg0: i32) -> (i32, i32) {
    %c0_i32 = arith.constant 0 : i32
    %c0_i32_0 = arith.constant 0 : i32
    %c0_i32_1 = arith.constant 0 : i32
    return %c0_i32, %c0_i32_0 : i32, i32
  }
  func.func @transform_2(%arg0: i32) -> (i32, i32) {
    %c0_i32 = arith.constant 0 : i32
    %c0_i32_0 = arith.constant 0 : i32
    %c0_i32_1 = arith.constant 0 : i32
    return %c0_i32, %c0_i32_0 : i32, i32
  }
  func.func @transform_3(%arg0: i32) -> (i32, i32) {
    %c0_i32 = arith.constant 0 : i32
    %c0_i32_0 = arith.constant 0 : i32
    %c0_i32_1 = arith.constant 0 : i32
    return %c0_i32, %c0_i32_0 : i32, i32
  }
  func.func @transform_4(%arg0: i32) -> (i32, i32) {
    %c0_i32 = arith.constant 0 : i32
    %c0_i32_0 = arith.constant 0 : i32
    %c0_i32_1 = arith.constant 0 : i32
    return %c0_i32, %c0_i32_0 : i32, i32
  }
  func.func @transform_5(%arg0: i32) -> (i32, i32) {
    %c0_i32 = arith.constant 0 : i32
    %c0_i32_0 = arith.constant 0 : i32
    %c0_i32_1 = arith.constant 0 : i32
    return %c0_i32, %c0_i32_0 : i32, i32
  }
  func.func @transform_6(%arg0: i32) -> (i32, i32) {
    %c0_i32 = arith.constant 0 : i32
    %c0_i32_0 = arith.constant 0 : i32
    %c0_i32_1 = arith.constant 0 : i32
    return %c0_i32, %c0_i32_0 : i32, i32
  }
  func.func @transform_7(%arg0: i32) -> (i32, i32) {
    %c0_i32 = arith.constant 0 : i32
    %c0_i32_0 = arith.constant 0 : i32
    %c0_i32_1 = arith.constant 0 : i32
    return %c0_i32, %c0_i32_0 : i32, i32
  }
  func.func @transform_8(%arg0: i32) -> (i32, i32) {
    %c0_i32 = arith.constant 0 : i32
    %c0_i32_0 = arith.constant 0 : i32
    %c0_i32_1 = arith.constant 0 : i32
    return %c0_i32, %c0_i32_0 : i32, i32
  }
  func.func @transform_9(%arg0: i32) -> (i32, i32) {
    %c0_i32 = arith.constant 0 : i32
    %c0_i32_0 = arith.constant 0 : i32
    %c0_i32_1 = arith.constant 0 : i32
    return %c0_i32, %c0_i32_0 : i32, i32
  }
}

</mosaic_0001>

<llo_original>
// kernel: tpu_custom_call.1
$region0: #{tpu_custom_call.1}
  #allocation0 [shape = 'u32[]', space=smem, size = 0x4, offset = 0x4, fixed_abs, tag = 'smem constant byte address 0x4 - core index']
  #allocation1 [shape = 'u32[144,128]{1,0:T(1,128)}', space=vmem, size = 0x12000, scoped, tag = 'internal scratch']
  #allocation2 [shape = 'f32[8,32]{1,0:T(8,128)}', space=vmem, size = 0x1000, scoped, tag = 'scratch operand']
  #allocation3 [shape = 'f32[64,96]{1,0:T(8,128)}', space=vmem, size = 0x8000, scoped, tag = 'scratch operand']
  %s0 = inlined_call_operand.vmem [shape: bf16[64,32], index: 0, kind: input, shape index: {}]
  %s1 = inlined_call_operand.vmem [shape: f32[8,32], index: 1, kind: input, shape index: {}]
  %s2 = inlined_call_operand.vmem [shape: bf16[32,96], index: 2, kind: input, shape index: {}]
  %s3 = inlined_call_operand.vmem [shape: bf16[32,96], index: 3, kind: input, shape index: {}]
  %s4 = inlined_call_operand.vmem [shape: f32[1,96], index: 4, kind: input, shape index: {}]
  %s5 = inlined_call_operand.vmem [shape: f32[1,96], index: 5, kind: input, shape index: {}]
  %s6 = inlined_call_operand.vmem [shape: f32[32,16], index: 6, kind: input, shape index: {}]
  %s7 = inlined_call_operand.vmem [shape: f32[1,16], index: 7, kind: input, shape index: {}]
  %s8 = inlined_call_operand.hbm [shape: f32[8,32], index: 8, kind: output, shape index: {0}]
  %s9 = inlined_call_operand.hbm [shape: f32[8,16], index: 9, kind: output, shape index: {1}]
  %10 = xla_tuple %s8, %s9
  %s11 = sld [smem:[#allocation0]]
  $region58: #{tpu_custom_call.1} parent=0
    _
  %s13 = ssub.s32 1, %s11
  %s14 = scalar_select 0, %s13, %s11
  $region1: #{tpu_custom_call.1} parent=0
    #allocation4 [shape = 'u8[4096]{0}', space=vmem, size = 0x1000, scoped, tag = 'output window, operand 0, single buffered']
    #allocation5 [shape = 's32[1]{0}', space=sflag, size = 0x4, scoped, tag = 'scoped memory for tpu_custom_call.1']
    #allocation6 [shape = 'u8[4096]{0}', space=vmem, size = 0x1000, scoped, tag = 'output window, operand 1, single buffered']
    #allocation7 [shape = 's32[1]{0}', space=sflag, size = 0x4, scoped, tag = 'scoped memory for tpu_custom_call.1']
    %15 = vsyncpa [#allocation5], 0
    %16 = vsyncpa [#allocation7], 0
    // Predicated region
    $region2: #{tpu_custom_call.1} parent=1 // pred_check
      _
    $region3: #{tpu_custom_call.1} parent=1 // pred_check_branch
      %18 = sbr.rel (0) target = $region5
    $region4: #{tpu_custom_call.1} parent=1 // pred_region
      _
    $region5: #{tpu_custom_call.1} parent=1 // pred_fallthru
      _
    // Predicated region
    $region6: #{tpu_custom_call.1} parent=1 // pred_check
      _
    $region7: #{tpu_custom_call.1} parent=1 // pred_check_branch
      %20 = sbr.rel (0) target = $region9
    $region8: #{tpu_custom_call.1} parent=1 // pred_region
      _
    $region9: #{tpu_custom_call.1} parent=1 // pred_fallthru
      _
    // Predicated region
    $region10: #{tpu_custom_call.1} parent=1 // pred_check
      _
    $region11: #{tpu_custom_call.1} parent=1 // pred_check_branch
      %22 = sbr.rel (0) target = $region13
    $region12: #{tpu_custom_call.1} parent=1 // pred_region
      _
    $region13: #{tpu_custom_call.1} parent=1 // pred_fallthru
      _
    // Predicated region
    $region14: #{tpu_custom_call.1} parent=1 // pred_check
      _
    $region15: #{tpu_custom_call.1} parent=1 // pred_check_branch
      %24 = sbr.rel (0) target = $region17
    $region16: #{tpu_custom_call.1} parent=1 // pred_region
      _
    $region17: #{tpu_custom_call.1} parent=1 // pred_fallthru
      _
    // Predicated region
    $region18: #{tpu_custom_call.1} parent=1 // pred_check
      _
    $region19: #{tpu_custom_call.1} parent=1 // pred_check_branch
      %26 = sbr.rel (0) target = $region21
    $region20: #{tpu_custom_call.1} parent=1 // pred_region
      _
    $region21: #{tpu_custom_call.1} parent=1 // pred_fallthru
      _
    // Predicated region
    $region22: #{tpu_custom_call.1} parent=1 // pred_check
      _
    $region23: #{tpu_custom_call.1} parent=1 // pred_check_branch
      %28 = sbr.rel (0) target = $region25
    $region24: #{tpu_custom_call.1} parent=1 // pred_region
      _
    $region25: #{tpu_custom_call.1} parent=1 // pred_fallthru
      _
    // Predicated region
    $region26: #{tpu_custom_call.1} parent=1 // pred_check
      _
    $region27: #{tpu_custom_call.1} parent=1 // pred_check_branch
      %30 = sbr.rel (0) target = $region29
    $region28: #{tpu_custom_call.1} parent=1 // pred_region
      _
    $region29: #{tpu_custom_call.1} parent=1 // pred_fallthru
      _
    // Predicated region
    $region30: #{tpu_custom_call.1} parent=1 // pred_check
      _
    $region31: #{tpu_custom_call.1} parent=1 // pred_check_branch
      %32 = sbr.rel (0) target = $region33
    $region32: #{tpu_custom_call.1} parent=1 // pred_region
      _
    $region33: #{tpu_custom_call.1} parent=1 // pred_fallthru
      _
    %p34 = scmp.eq.s32.totalorder 0, 0
    // Predicated region
    $region34: #{tpu_custom_call.1} parent=1 // pred_check
      %p35 = pneg %p34
    $region35: #{tpu_custom_call.1} parent=1 // pred_check_branch
      %37 = sbr.rel (%p35) target = $region37
    $region36: #{tpu_custom_call.1} parent=1 // pred_region
      %v38 = vld [vmem:[%s1] sm:$0xff]
      %vm39 = vcmask 261120
      %40 = vst.msk [vmem:[#allocation2] sm:$0xff] %vm39, %v38
    $region37: #{tpu_custom_call.1} parent=1 // pred_fallthru
      _
    %v41 = vld [vmem:[%s0] sm:$0xf]
    %v42 = vld [vmem:[%s0 + $0x4] sm:$0xf]
    %v43 = vld [vmem:[%s0 + $0x8] sm:$0xf]
    %v44 = vld [vmem:[%s0 + $0xc] sm:$0xf]
    %v45 = vld [vmem:[%s0 + $0x10] sm:$0xf]
    %v46 = vld [vmem:[%s0 + $0x14] sm:$0xf]
    %v47 = vld [vmem:[%s0 + $0x18] sm:$0xf]
    %v48 = vld [vmem:[%s0 + $0x1c] sm:$0xf]
    %v49 = vld [vmem:[%s2] sm:$0xf]
    %v50 = vld [vmem:[%s2 + $0x4] sm:$0xf]
    %v51 = vld [vmem:[%s2 + $0x8] sm:$0xf]
    %v52 = vld [vmem:[%s2 + $0xc] sm:$0xf]
    %v53 = vld [vmem:[%s4] sm:$0x1]
    %v55 = vlaneseq
    %v56 = vshrl.u32 %v55, 7
    %v57 = vsub.s32 0, %v56
    %v58 = vrot.slane %v53, %v57
    %v68 = vunpack.c.l.b16 %v41
    %v69 = vunpack.c.l.b16 %v42
    %v70 = vunpack.c.l.b16 %v43
    %v71 = vunpack.c.l.b16 %v44
    %v72 = vunpack.c.l.b16 %v45
    %v73 = vunpack.c.l.b16 %v46
    %v74 = vunpack.c.l.b16 %v47
    %v75 = vunpack.c.l.b16 %v48
    %v76 = vpack.c.b16 %v69, %v68
    %v77 = vpack.c.b16 %v71, %v70
    %v78 = vpack.c.b16 %v73, %v72
    %v79 = vpack.c.b16 %v75, %v74
    %v84 = vunpack.c.l.b16 %v49
    %v85 = vunpack.c.l.b16 %v50
    %v86 = vunpack.c.l.b16 %v51
    %v87 = vunpack.c.l.b16 %v52
    %v88 = vpack.c.b16 %v85, %v84
    %v89 = vpack.c.b16 %v87, %v86
    %vm92 = vcmask 261120
    %v94 = vsel %vm92, %v76, 0
    %v97 = vsel %vm92, %v77, 0
    %v100 = vsel %vm92, %v78, 0
    %v103 = vsel %vm92, %v79, 0
    %105 = vmatprep.subr.bf16.mxu0 0
    %106 = vmatpush1.bf16.msra.mxu0 %v88
    %107 = vmatprep.subr.bf16.mxu0 0
    %108 = vmatpush1.bf16.msra.mxu0 %v89
    %109 = vmatprep.subr.bf16.mxu0 0
    %110 = vmatpush1.bf16.msra.mxu0 0
    %111 = vmatprep.subr.bf16.mxu0 0
    %112 = vmatpush1.bf16.msra.mxu0 0
    %113 = vmatprep.subr.bf16.mxu0 0
    %114 = vmatpush1.bf16.msra.mxu0 0
    %115 = vmatprep.subr.bf16.mxu0 0
    %116 = vmatpush1.bf16.msra.mxu0 0
    %117 = vmatprep.subr.bf16.mxu0 0
    %118 = vmatpush1.bf16.msra.mxu0 0
    %119 = vmatprep.subr.bf16.mxu0 0
    %120 = vmatpush1.bf16.msra.mxu0 0
    %121 = vmatprep.subr.bf16.mxu0 0
    %122 = vmatpush1.bf16.msra.mxu0 0
    %123 = vmatprep.subr.bf16.mxu0 0
    %124 = vmatpush1.bf16.msra.mxu0 0
    %125 = vmatprep.subr.bf16.mxu0 0
    %126 = vmatpush1.bf16.msra.mxu0 0
    %127 = vmatprep.subr.bf16.mxu0 0
    %128 = vmatpush1.bf16.msra.mxu0 0
    %129 = vmatprep.subr.bf16.mxu0 0
    %130 = vmatpush1.bf16.msra.mxu0 0
    %131 = vmatprep.subr.bf16.mxu0 0
    %132 = vmatpush1.bf16.msra.mxu0 0
    %133 = vmatprep.subr.bf16.mxu0 0
    %134 = vmatpush1.bf16.msra.mxu0 0
    %135 = vmatprep.subr.bf16.mxu0 0
    %136 = vmatpush1.bf16.msra.mxu0 0
    %137 = vmatprep.mubr.bf16.mxu0 0
    %138 = vmatmul.mubr.bf16.gmra.mrb[0].mxu0 %v94
    %v139 = vpop.f32.mrb[0].mxu0
    %v140 = vadd.f32 %v58, %v139
    %v141 = vpop.f32.mrb[0].mxu0
    %v142 = vpop.f32.mrb[0].mxu0
    %v143 = vadd.f32 %v58, %v142
    %v144 = vpop.f32.mrb[0].mxu0
    %145 = vmatprep.mubr.bf16.mxu0 0
    %146 = vmatmul.mubr.bf16.gmra.mrb[0].mxu0 %v97
    %v147 = vpop.f32.mrb[0].mxu0
    %v148 = vadd.f32 %v58, %v147
    %v149 = vpop.f32.mrb[0].mxu0
    %v150 = vpop.f32.mrb[0].mxu0
    %v151 = vadd.f32 %v58, %v150
    %v152 = vpop.f32.mrb[0].mxu0
    %153 = vmatprep.mubr.bf16.mxu0 0
    %154 = vmatmul.mubr.bf16.gmra.mrb[0].mxu0 %v100
    %v155 = vpop.f32.mrb[0].mxu0
    %v156 = vadd.f32 %v58, %v155
    %v157 = vpop.f32.mrb[0].mxu0
    %v158 = vpop.f32.mrb[0].mxu0
    %v159 = vadd.f32 %v58, %v158
    %v160 = vpop.f32.mrb[0].mxu0
    %161 = vmatprep.mubr.bf16.mxu0 0
    %162 = vmatmul.mubr.bf16.gmra.mrb[0].mxu0 %v103
    %v163 = vpop.f32.mrb[0].mxu0
    %v164 = vadd.f32 %v58, %v163
    %v165 = vpop.f32.mrb[0].mxu0
    %v166 = vpop.f32.mrb[0].mxu0
    %v167 = vadd.f32 %v58, %v166
    %v168 = vpop.f32.mrb[0].mxu0
    %169 = vdwg.mxu0
    %vm170 = vcmask 785408
    %171 = vst.msk [vmem:[#allocation3] sm:$0xff] %vm170, %v140
    %172 = vst.msk [vmem:[#allocation3 + $0x8] sm:$0xff] %vm170, %v143
    %173 = vst.msk [vmem:[#allocation3 + $0x10] sm:$0xff] %vm170, %v148
    %174 = vst.msk [vmem:[#allocation3 + $0x18] sm:$0xff] %vm170, %v151
    %175 = vst.msk [vmem:[#allocation3 + $0x20] sm:$0xff] %vm170, %v156
    %176 = vst.msk [vmem:[#allocation3 + $0x28] sm:$0xff] %vm170, %v159
    %177 = vst.msk [vmem:[#allocation3 + $0x30] sm:$0xff] %vm170, %v164
    %178 = vst.msk [vmem:[#allocation3 + $0x38] sm:$0xff] %vm170, %v167
    %v179 = vld [vmem:[%s3] sm:$0xf]
    %v180 = vld [vmem:[%s3 + $0x4] sm:$0xf]
    %v181 = vld [vmem:[%s3 + $0x8] sm:$0xf]
    %v182 = vld [vmem:[%s3 + $0xc] sm:$0xf]
    %v183 = vld [vmem:[%s5] sm:$0x1]
    %v184 = vld [vmem:[#allocation2] sm:$0xff]
    %v185 = vld [vmem:[#allocation3] sm:$0xff]
    %v186 = vpack.c.bf16 %v184, %v184
    %v188 = vlaneseq
    %v189 = vshrl.u32 %v188, 7
    %v190 = vsub.s32 0, %v189
    %v191 = vrot.slane %v183, %v190
    %v197 = vunpack.c.l.b16 %v179
    %v198 = vunpack.c.l.b16 %v180
    %v199 = vunpack.c.l.b16 %v181
    %v200 = vunpack.c.l.b16 %v182
    %v201 = vpack.c.b16 %v198, %v197
    %v202 = vpack.c.b16 %v200, %v199
    %v206 = vsel %vm92, %v186, 0
    %208 = vmatprep.subr.bf16.mxu0 0
    %209 = vmatpush1.bf16.msra.mxu0 %v201
    %210 = vmatprep.subr.bf16.mxu0 0
    %211 = vmatpush1.bf16.msra.mxu0 %v202
    %212 = vmatprep.subr.bf16.mxu0 0
    %213 = vmatpush1.bf16.msra.mxu0 0
    %214 = vmatprep.subr.bf16.mxu0 0
    %215 = vmatpush1.bf16.msra.mxu0 0
    %216 = vmatprep.subr.bf16.mxu0 0
    %217 = vmatpush1.bf16.msra.mxu0 0
    %218 = vmatprep.subr.bf16.mxu0 0
    %219 = vmatpush1.bf16.msra.mxu0 0
    %220 = vmatprep.subr.bf16.mxu0 0
    %221 = vmatpush1.bf16.msra.mxu0 0
    %222 = vmatprep.subr.bf16.mxu0 0
    %223 = vmatpush1.bf16.msra.mxu0 0
    %224 = vmatprep.subr.bf16.mxu0 0
    %225 = vmatpush1.bf16.msra.mxu0 0
    %226 = vmatprep.subr.bf16.mxu0 0
    %227 = vmatpush1.bf16.msra.mxu0 0
    %228 = vmatprep.subr.bf16.mxu0 0
    %229 = vmatpush1.bf16.msra.mxu0 0
    %230 = vmatprep.subr.bf16.mxu0 0
    %231 = vmatpush1.bf16.msra.mxu0 0
    %232 = vmatprep.subr.bf16.mxu0 0
    %233 = vmatpush1.bf16.msra.mxu0 0
    %234 = vmatprep.subr.bf16.mxu0 0
    %235 = vmatpush1.bf16.msra.mxu0 0
    %236 = vmatprep.subr.bf16.mxu0 0
    %237 = vmatpush1.bf16.msra.mxu0 0
    %238 = vmatprep.subr.bf16.mxu0 0
    %239 = vmatpush1.bf16.msra.mxu0 0
    %240 = vmatprep.mubr.bf16.mxu0 0
    %241 = vmatmul.mubr.bf16.gmra.mrb[0].mxu0 %v206
    %v242 = vpop.f32.mrb[0].mxu0
    %v243 = vadd.f32 %v191, %v242
    %v244 = vpop.f32.mrb[0].mxu0
    %v245 = vpop.f32.mrb[0].mxu0
    %v246 = vpop.f32.mrb[0].mxu0
    %247 = vdwg.mxu0
    %v248 = vadd.f32 %v185, %v243
    %v249 = vxor.u32 %v248, 2147483648
    %v250 = vmul.f32 %v249, 1.442695
    %v251 = vpow.pop %v250
    %v252 = vadd.f32 %v251, 1.0
    %v253 = vrcp.pop %v252
    %v254 = vmul.f32 1.0, %v253
    %256 = vrot.lane.b32.xlu0 %v243, 64
    %v257 = vpop.permute.xlu0 %256
    %v259 = vmul.f32 %v254, %v257
    %261 = vrot.lane.b32.xlu0 %v259, 64
    %v262 = vpop.permute.xlu0 %261
    %v264 = vadd.f32 %v185, %v262
    %v265 = vtanh.pop %v264
    %v266 = vsub.f32 1.0, %v254
    %268 = vrot.lane.b32.xlu0 %v265, 96
    %v269 = vpop.permute.xlu0 %268
    %v271 = vmul.f32 %v266, %v269
    %273 = vrot.lane.b32.xlu0 %v184, 32
    %v274 = vpop.permute.xlu0 %273
    %v276 = vmul.f32 %v254, %v274
    %v277 = vadd.f32 %v271, %v276
    %s278 = scalar_lea.vmem [#allocation3], 8
    %v279 = vld [vmem:[%s278] sm:$0xff]
    %v280 = vpack.c.bf16 %v277, %v277
    %282 = vrot.lane.b32.xlu0 %v280, 96
    %v283 = vpop.permute.xlu0 %282
    %v285 = vsel %vm92, %v283, 0
    %287 = vmatprep.subr.bf16.mxu0 0
    %288 = vmatpush1.bf16.msra.mxu0 %v201
    %289 = vmatprep.subr.bf16.mxu0 0
    %290 = vmatpush1.bf16.msra.mxu0 %v202
    %291 = vmatprep.subr.bf16.mxu0 0
    %292 = vmatpush1.bf16.msra.mxu0 0
    %293 = vmatprep.subr.bf16.mxu0 0
    %294 = vmatpush1.bf16.msra.mxu0 0
    %295 = vmatprep.subr.bf16.mxu0 0
    %296 = vmatpush1.bf16.msra.mxu0 0
    %297 = vmatprep.subr.bf16.mxu0 0
    %298 = vmatpush1.bf16.msra.mxu0 0
    %299 = vmatprep.subr.bf16.mxu0 0
    %300 = vmatpush1.bf16.msra.mxu0 0
    %301 = vmatprep.subr.bf16.mxu0 0
    %302 = vmatpush1.bf16.msra.mxu0 0
    %303 = vmatprep.subr.bf16.mxu0 0
    %304 = vmatpush1.bf16.msra.mxu0 0
    %305 = vmatprep.subr.bf16.mxu0 0
    %306 = vmatpush1.bf16.msra.mxu0 0
    %307 = vmatprep.subr.bf16.mxu0 0
    %308 = vmatpush1.bf16.msra.mxu0 0
    %309 = vmatprep.subr.bf16.mxu0 0
    %310 = vmatpush1.bf16.msra.mxu0 0
    %311 = vmatprep.subr.bf16.mxu0 0
    %312 = vmatpush1.bf16.msra.mxu0 0
    %313 = vmatprep.subr.bf16.mxu0 0
    %314 = vmatpush1.bf16.msra.mxu0 0
    %315 = vmatprep.subr.bf16.mxu0 0
    %316 = vmatpush1.bf16.msra.mxu0 0
    %317 = vmatprep.subr.bf16.mxu0 0
    %318 = vmatpush1.bf16.msra.mxu0 0
    %319 = vmatprep.mubr.bf16.mxu0 0
    %320 = vmatmul.mubr.bf16.gmra.mrb[0].mxu0 %v285
    %v321 = vpop.f32.mrb[0].mxu0
    %v322 = vadd.f32 %v191, %v321
    %v323 = vpop.f32.mrb[0].mxu0
    %v324 = vpop.f32.mrb[0].mxu0
    %v325 = vpop.f32.mrb[0].mxu0
    %326 = vdwg.mxu0
    %v327 = vadd.f32 %v279, %v322
    %v328 = vxor.u32 %v327, 2147483648
    %v329 = vmul.f32 %v328, 1.442695
    %v330 = vpow.pop %v329
    %v331 = vadd.f32 %v330, 1.0
    %v332 = vrcp.pop %v331
    %v333 = vmul.f32 1.0, %v332
    %335 = vrot.lane.b32.xlu0 %v322, 64
    %v336 = vpop.permute.xlu0 %335
    %v338 = vmul.f32 %v333, %v336
    %340 = vrot.lane.b32.xlu0 %v338, 64
    %v341 = vpop.permute.xlu0 %340
    %v343 = vadd.f32 %v279, %v341
    %v344 = vtanh.pop %v343
    %v345 = vsub.f32 1.0, %v333
    %347 = vrot.lane.b32.xlu0 %v344, 96
    %v348 = vpop.permute.xlu0 %347
    %v350 = vmul.f32 %v345, %v348
    %v351 = vmul.f32 %v333, %v277
    %v352 = vadd.f32 %v350, %v351
    %s353 = scalar_lea.vmem [#allocation3], 16
    %v354 = vld [vmem:[%s353] sm:$0xff]
    %v355 = vpack.c.bf16 %v352, %v352
    %357 = vrot.lane.b32.xlu0 %v355, 96
    %v358 = vpop.permute.xlu0 %357
    %v360 = vsel %vm92, %v358, 0
    %362 = vmatprep.subr.bf16.mxu0 0
    %363 = vmatpush1.bf16.msra.mxu0 %v201
    %364 = vmatprep.subr.bf16.mxu0 0
    %365 = vmatpush1.bf16.msra.mxu0 %v202
    %366 = vmatprep.subr.bf16.mxu0 0
    %367 = vmatpush1.bf16.msra.mxu0 0
    %368 = vmatprep.subr.bf16.mxu0 0
    %369 = vmatpush1.bf16.msra.mxu0 0
    %370 = vmatprep.subr.bf16.mxu0 0
    %371 = vmatpush1.bf16.msra.mxu0 0
    %372 = vmatprep.subr.bf16.mxu0 0
    %373 = vmatpush1.bf16.msra.mxu0 0
    %374 = vmatprep.subr.bf16.mxu0 0
    %375 = vmatpush1.bf16.msra.mxu0 0
    %376 = vmatprep.subr.bf16.mxu0 0
    %377 = vmatpush1.bf16.msra.mxu0 0
    %378 = vmatprep.subr.bf16.mxu0 0
    %379 = vmatpush1.bf16.msra.mxu0 0
    %380 = vmatprep.subr.bf16.mxu0 0
    %381 = vmatpush1.bf16.msra.mxu0 0
    %382 = vmatprep.subr.bf16.mxu0 0
    %383 = vmatpush1.bf16.msra.mxu0 0
    %384 = vmatprep.subr.bf16.mxu0 0
    %385 = vmatpush1.bf16.msra.mxu0 0
    %386 = vmatprep.subr.bf16.mxu0 0
    %387 = vmatpush1.bf16.msra.mxu0 0
    %388 = vmatprep.subr.bf16.mxu0 0
    %389 = vmatpush1.bf16.msra.mxu0 0
    %390 = vmatprep.subr.bf16.mxu0 0
    %391 = vmatpush1.bf16.msra.mxu0 0
    %392 = vmatprep.subr.bf16.mxu0 0
    %393 = vmatpush1.bf16.msra.mxu0 0
    %394 = vmatprep.mubr.bf16.mxu0 0
    %395 = vmatmul.mubr.bf16.gmra.mrb[0].mxu0 %v360
    %v396 = vpop.f32.mrb[0].mxu0
    %v397 = vadd.f32 %v191, %v396
    %v398 = vpop.f32.mrb[0].mxu0
    %v399 = vpop.f32.mrb[0].mxu0
    %v400 = vpop.f32.mrb[0].mxu0
    %401 = vdwg.mxu0
    %v402 = vadd.f32 %v354, %v397
    %v403 = vxor.u32 %v402, 2147483648
    %v404 = vmul.f32 %v403, 1.442695
    %v405 = vpow.pop %v404
    %v406 = vadd.f32 %v405, 1.0
    %v407 = vrcp.pop %v406
    %v408 = vmul.f32 1.0, %v407
    %410 = vrot.lane.b32.xlu0 %v397, 64
    %v411 = vpop.permute.xlu0 %410
    %v413 = vmul.f32 %v408, %v411
    %415 = vrot.lane.b32.xlu0 %v413, 64
    %v416 = vpop.permute.xlu0 %415
    %v418 = vadd.f32 %v354, %v416
    %v419 = vtanh.pop %v418
    %v420 = vsub.f32 1.0, %v408
    %422 = vrot.lane.b32.xlu0 %v419, 96
    %v423 = vpop.permute.xlu0 %422
    %v425 = vmul.f32 %v420, %v423
    %v426 = vmul.f32 %v408, %v352
    %v427 = vadd.f32 %v425, %v426
    %s428 = scalar_lea.vmem [#allocation3], 24
    %v429 = vld [vmem:[%s428] sm:$0xff]
    %v430 = vpack.c.bf16 %v427, %v427
    %432 = vrot.lane.b32.xlu0 %v430, 96
    %v433 = vpop.permute.xlu0 %432
    %v435 = vsel %vm92, %v433, 0
    %437 = vmatprep.subr.bf16.mxu0 0
    %438 = vmatpush1.bf16.msra.mxu0 %v201
    %439 = vmatprep.subr.bf16.mxu0 0
    %440 = vmatpush1.bf16.msra.mxu0 %v202
    %441 = vmatprep.subr.bf16.mxu0 0
    %442 = vmatpush1.bf16.msra.mxu0 0
    %443 = vmatprep.subr.bf16.mxu0 0
    %444 = vmatpush1.bf16.msra.mxu0 0
    %445 = vmatprep.subr.bf16.mxu0 0
    %446 = vmatpush1.bf16.msra.mxu0 0
    %447 = vmatprep.subr.bf16.mxu0 0
    %448 = vmatpush1.bf16.msra.mxu0 0
    %449 = vmatprep.subr.bf16.mxu0 0
    %450 = vmatpush1.bf16.msra.mxu0 0
    %451 = vmatprep.subr.bf16.mxu0 0
    %452 = vmatpush1.bf16.msra.mxu0 0
    %453 = vmatprep.subr.bf16.mxu0 0
    %454 = vmatpush1.bf16.msra.mxu0 0
    %455 = vmatprep.subr.bf16.mxu0 0
    %456 = vmatpush1.bf16.msra.mxu0 0
    %457 = vmatprep.subr.bf16.mxu0 0
    %458 = vmatpush1.bf16.msra.mxu0 0
    %459 = vmatprep.subr.bf16.mxu0 0
    %460 = vmatpush1.bf16.msra.mxu0 0
    %461 = vmatprep.subr.bf16.mxu0 0
    %462 = vmatpush1.bf16.msra.mxu0 0
    %463 = vmatprep.subr.bf16.mxu0 0
    %464 = vmatpush1.bf16.msra.mxu0 0
    %465 = vmatprep.subr.bf16.mxu0 0
    %466 = vmatpush1.bf16.msra.mxu0 0
    %467 = vmatprep.subr.bf16.mxu0 0
    %468 = vmatpush1.bf16.msra.mxu0 0
    %469 = vmatprep.mubr.bf16.mxu0 0
    %470 = vmatmul.mubr.bf16.gmra.mrb[0].mxu0 %v435
    %v471 = vpop.f32.mrb[0].mxu0
    %v472 = vadd.f32 %v191, %v471
    %v473 = vpop.f32.mrb[0].mxu0
    %v474 = vpop.f32.mrb[0].mxu0
    %v475 = vpop.f32.mrb[0].mxu0
    %476 = vdwg.mxu0
    %v477 = vadd.f32 %v429, %v472
    %v478 = vxor.u32 %v477, 2147483648
    %v479 = vmul.f32 %v478, 1.442695
    %v480 = vpow.pop %v479
    %v481 = vadd.f32 %v480, 1.0
    %v482 = vrcp.pop %v481
    %v483 = vmul.f32 1.0, %v482
    %485 = vrot.lane.b32.xlu0 %v472, 64
    %v486 = vpop.permute.xlu0 %485
    %v488 = vmul.f32 %v483, %v486
    %490 = vrot.lane.b32.xlu0 %v488, 64
    %v491 = vpop.permute.xlu0 %490
    %v493 = vadd.f32 %v429, %v491
    %v494 = vtanh.pop %v493
    %v495 = vsub.f32 1.0, %v483
    %497 = vrot.lane.b32.xlu0 %v494, 96
    %v498 = vpop.permute.xlu0 %497
    %v500 = vmul.f32 %v495, %v498
    %v501 = vmul.f32 %v483, %v427
    %v502 = vadd.f32 %v500, %v501
    %s503 = scalar_lea.vmem [#allocation3], 32
    %v504 = vld [vmem:[%s503] sm:$0xff]
    %v505 = vpack.c.bf16 %v502, %v502
    %507 = vrot.lane.b32.xlu0 %v505, 96
    %v508 = vpop.permute.xlu0 %507
    %v510 = vsel %vm92, %v508, 0
    %512 = vmatprep.subr.bf16.mxu0 0
    %513 = vmatpush1.bf16.msra.mxu0 %v201
    %514 = vmatprep.subr.bf16.mxu0 0
    %515 = vmatpush1.bf16.msra.mxu0 %v202
    %516 = vmatprep.subr.bf16.mxu0 0
    %517 = vmatpush1.bf16.msra.mxu0 0
    %518 = vmatprep.subr.bf16.mxu0 0
    %519 = vmatpush1.bf16.msra.mxu0 0
    %520 = vmatprep.subr.bf16.mxu0 0
    %521 = vmatpush1.bf16.msra.mxu0 0
    %522 = vmatprep.subr.bf16.mxu0 0
    %523 = vmatpush1.bf16.msra.mxu0 0
    %524 = vmatprep.subr.bf16.mxu0 0
    %525 = vmatpush1.bf16.msra.mxu0 0
    %526 = vmatprep.subr.bf16.mxu0 0
    %527 = vmatpush1.bf16.msra.mxu0 0
    %528 = vmatprep.subr.bf16.mxu0 0
    %529 = vmatpush1.bf16.msra.mxu0 0
    %530 = vmatprep.subr.bf16.mxu0 0
    %531 = vmatpush1.bf16.msra.mxu0 0
    %532 = vmatprep.subr.bf16.mxu0 0
    %533 = vmatpush1.bf16.msra.mxu0 0
    %534 = vmatprep.subr.bf16.mxu0 0
    %535 = vmatpush1.bf16.msra.mxu0 0
    %536 = vmatprep.subr.bf16.mxu0 0
    %537 = vmatpush1.bf16.msra.mxu0 0
    %538 = vmatprep.subr.bf16.mxu0 0
    %539 = vmatpush1.bf16.msra.mxu0 0
    %540 = vmatprep.subr.bf16.mxu0 0
    %541 = vmatpush1.bf16.msra.mxu0 0
    %542 = vmatprep.subr.bf16.mxu0 0
    %543 = vmatpush1.bf16.msra.mxu0 0
    %544 = vmatprep.mubr.bf16.mxu0 0
    %545 = vmatmul.mubr.bf16.gmra.mrb[0].mxu0 %v510
    %v546 = vpop.f32.mrb[0].mxu0
    %v547 = vadd.f32 %v191, %v546
    %v548 = vpop.f32.mrb[0].mxu0
    %v549 = vpop.f32.mrb[0].mxu0
    %v550 = vpop.f32.mrb[0].mxu0
    %551 = vdwg.mxu0
    %v552 = vadd.f32 %v504, %v547
    %v553 = vxor.u32 %v552, 2147483648
    %v554 = vmul.f32 %v553, 1.442695
    %v555 = vpow.pop %v554
    %v556 = vadd.f32 %v555, 1.0
    %v557 = vrcp.pop %v556
    %v558 = vmul.f32 1.0, %v557
    %560 = vrot.lane.b32.xlu0 %v547, 64
    %v561 = vpop.permute.xlu0 %560
    %v563 = vmul.f32 %v558, %v561
    %565 = vrot.lane.b32.xlu0 %v563, 64
    %v566 = vpop.permute.xlu0 %565
    %v568 = vadd.f32 %v504, %v566
    %v569 = vtanh.pop %v568
    %v570 = vsub.f32 1.0, %v558
    %572 = vrot.lane.b32.xlu0 %v569, 96
    %v573 = vpop.permute.xlu0 %572
    %v575 = vmul.f32 %v570, %v573
    %v576 = vmul.f32 %v558, %v502
    %v577 = vadd.f32 %v575, %v576
    %s578 = scalar_lea.vmem [#allocation3], 40
    %v579 = vld [vmem:[%s578] sm:$0xff]
    %v580 = vpack.c.bf16 %v577, %v577
    %582 = vrot.lane.b32.xlu0 %v580, 96
    %v583 = vpop.permute.xlu0 %582
    %v585 = vsel %vm92, %v583, 0
    %587 = vmatprep.subr.bf16.mxu0 0
    %588 = vmatpush1.bf16.msra.mxu0 %v201
    %589 = vmatprep.subr.bf16.mxu0 0
    %590 = vmatpush1.bf16.msra.mxu0 %v202
    %591 = vmatprep.subr.bf16.mxu0 0
    %592 = vmatpush1.bf16.msra.mxu0 0
    %593 = vmatprep.subr.bf16.mxu0 0
    %594 = vmatpush1.bf16.msra.mxu0 0
    %595 = vmatprep.subr.bf16.mxu0 0
    %596 = vmatpush1.bf16.msra.mxu0 0
    %597 = vmatprep.subr.bf16.mxu0 0
    %598 = vmatpush1.bf16.msra.mxu0 0
    %599 = vmatprep.subr.bf16.mxu0 0
    %600 = vmatpush1.bf16.msra.mxu0 0
    %601 = vmatprep.subr.bf16.mxu0 0
    %602 = vmatpush1.bf16.msra.mxu0 0
    %603 = vmatprep.subr.bf16.mxu0 0
    %604 = vmatpush1.bf16.msra.mxu0 0
    %605 = vmatprep.subr.bf16.mxu0 0
    %606 = vmatpush1.bf16.msra.mxu0 0
    %607 = vmatprep.subr.bf16.mxu0 0
    %608 = vmatpush1.bf16.msra.mxu0 0
    %609 = vmatprep.subr.bf16.mxu0 0
    %610 = vmatpush1.bf16.msra.mxu0 0
    %611 = vmatprep.subr.bf16.mxu0 0
    %612 = vmatpush1.bf16.msra.mxu0 0
    %613 = vmatprep.subr.bf16.mxu0 0
    %614 = vmatpush1.bf16.msra.mxu0 0
    %615 = vmatprep.subr.bf16.mxu0 0
    %616 = vmatpush1.bf16.msra.mxu0 0
    %617 = vmatprep.subr.bf16.mxu0 0
    %618 = vmatpush1.bf16.msra.mxu0 0
    %619 = vmatprep.mubr.bf16.mxu0 0
    %620 = vmatmul.mubr.bf16.gmra.mrb[0].mxu0 %v585
    %v621 = vpop.f32.mrb[0].mxu0
    %v622 = vadd.f32 %v191, %v621
    %v623 = vpop.f32.mrb[0].mxu0
    %v624 = vpop.f32.mrb[0].mxu0
    %v625 = vpop.f32.mrb[0].mxu0
    %626 = vdwg.mxu0
    %v627 = vadd.f32 %v579, %v622
    %v628 = vxor.u32 %v627, 2147483648
    %v629 = vmul.f32 %v628, 1.442695
    %v630 = vpow.pop %v629
    %v631 = vadd.f32 %v630, 1.0
    %v632 = vrcp.pop %v631
    %v633 = vmul.f32 1.0, %v632
    %635 = vrot.lane.b32.xlu0 %v622, 64
    %v636 = vpop.permute.xlu0 %635
    %v638 = vmul.f32 %v633, %v636
    %640 = vrot.lane.b32.xlu0 %v638, 64
    %v641 = vpop.permute.xlu0 %640
    %v643 = vadd.f32 %v579, %v641
    %v644 = vtanh.pop %v643
    %v645 = vsub.f32 1.0, %v633
    %647 = vrot.lane.b32.xlu0 %v644, 96
    %v648 = vpop.permute.xlu0 %647
    %v650 = vmul.f32 %v645, %v648
    %v651 = vmul.f32 %v633, %v577
    %v652 = vadd.f32 %v650, %v651
    %s653 = scalar_lea.vmem [#allocation3], 48
    %v654 = vld [vmem:[%s653] sm:$0xff]
    %v655 = vpack.c.bf16 %v652, %v652
    %657 = vrot.lane.b32.xlu0 %v655, 96
    %v658 = vpop.permute.xlu0 %657
    %v660 = vsel %vm92, %v658, 0
    %662 = vmatprep.subr.bf16.mxu0 0
    %663 = vmatpush1.bf16.msra.mxu0 %v201
    %664 = vmatprep.subr.bf16.mxu0 0
    %665 = vmatpush1.bf16.msra.mxu0 %v202
    %666 = vmatprep.subr.bf16.mxu0 0
    %667 = vmatpush1.bf16.msra.mxu0 0
    %668 = vmatprep.subr.bf16.mxu0 0
    %669 = vmatpush1.bf16.msra.mxu0 0
    %670 = vmatprep.subr.bf16.mxu0 0
    %671 = vmatpush1.bf16.msra.mxu0 0
    %672 = vmatprep.subr.bf16.mxu0 0
    %673 = vmatpush1.bf16.msra.mxu0 0
    %674 = vmatprep.subr.bf16.mxu0 0
    %675 = vmatpush1.bf16.msra.mxu0 0
    %676 = vmatprep.subr.bf16.mxu0 0
    %677 = vmatpush1.bf16.msra.mxu0 0
    %678 = vmatprep.subr.bf16.mxu0 0
    %679 = vmatpush1.bf16.msra.mxu0 0
    %680 = vmatprep.subr.bf16.mxu0 0
    %681 = vmatpush1.bf16.msra.mxu0 0
    %682 = vmatprep.subr.bf16.mxu0 0
    %683 = vmatpush1.bf16.msra.mxu0 0
    %684 = vmatprep.subr.bf16.mxu0 0
    %685 = vmatpush1.bf16.msra.mxu0 0
    %686 = vmatprep.subr.bf16.mxu0 0
    %687 = vmatpush1.bf16.msra.mxu0 0
    %688 = vmatprep.subr.bf16.mxu0 0
    %689 = vmatpush1.bf16.msra.mxu0 0
    %690 = vmatprep.subr.bf16.mxu0 0
    %691 = vmatpush1.bf16.msra.mxu0 0
    %692 = vmatprep.subr.bf16.mxu0 0
    %693 = vmatpush1.bf16.msra.mxu0 0
    %694 = vmatprep.mubr.bf16.mxu0 0
    %695 = vmatmul.mubr.bf16.gmra.mrb[0].mxu0 %v660
    %v696 = vpop.f32.mrb[0].mxu0
    %v697 = vadd.f32 %v191, %v696
    %v698 = vpop.f32.mrb[0].mxu0
    %v699 = vpop.f32.mrb[0].mxu0
    %v700 = vpop.f32.mrb[0].mxu0
    %701 = vdwg.mxu0
    %v702 = vadd.f32 %v654, %v697
    %v703 = vxor.u32 %v702, 2147483648
    %v704 = vmul.f32 %v703, 1.442695
    %v705 = vpow.pop %v704
    %v706 = vadd.f32 %v705, 1.0
    %v707 = vrcp.pop %v706
    %v708 = vmul.f32 1.0, %v707
    %710 = vrot.lane.b32.xlu0 %v697, 64
    %v711 = vpop.permute.xlu0 %710
    %v713 = vmul.f32 %v708, %v711
    %715 = vrot.lane.b32.xlu0 %v713, 64
    %v716 = vpop.permute.xlu0 %715
    %v718 = vadd.f32 %v654, %v716
    %v719 = vtanh.pop %v718
    %v720 = vsub.f32 1.0, %v708
    %722 = vrot.lane.b32.xlu0 %v719, 96
    %v723 = vpop.permute.xlu0 %722
    %v725 = vmul.f32 %v720, %v723
    %v726 = vmul.f32 %v708, %v652
    %v727 = vadd.f32 %v725, %v726
    %s728 = scalar_lea.vmem [#allocation3], 56
    %v729 = vld [vmem:[%s728] sm:$0xff]
    %v730 = vpack.c.bf16 %v727, %v727
    %732 = vrot.lane.b32.xlu0 %v730, 96
    %v733 = vpop.permute.xlu0 %732
    %v735 = vsel %vm92, %v733, 0
    %737 = vmatprep.subr.bf16.mxu0 0
    %738 = vmatpush1.bf16.msra.mxu0 %v201
    %739 = vmatprep.subr.bf16.mxu0 0
    %740 = vmatpush1.bf16.msra.mxu0 %v202
    %741 = vmatprep.subr.bf16.mxu0 0
    %742 = vmatpush1.bf16.msra.mxu0 0
    %743 = vmatprep.subr.bf16.mxu0 0
    %744 = vmatpush1.bf16.msra.mxu0 0
    %745 = vmatprep.subr.bf16.mxu0 0
    %746 = vmatpush1.bf16.msra.mxu0 0
    %747 = vmatprep.subr.bf16.mxu0 0
    %748 = vmatpush1.bf16.msra.mxu0 0
    %749 = vmatprep.subr.bf16.mxu0 0
    %750 = vmatpush1.bf16.msra.mxu0 0
    %751 = vmatprep.subr.bf16.mxu0 0
    %752 = vmatpush1.bf16.msra.mxu0 0
    %753 = vmatprep.subr.bf16.mxu0 0
    %754 = vmatpush1.bf16.msra.mxu0 0
    %755 = vmatprep.subr.bf16.mxu0 0
    %756 = vmatpush1.bf16.msra.mxu0 0
    %757 = vmatprep.subr.bf16.mxu0 0
    %758 = vmatpush1.bf16.msra.mxu0 0
    %759 = vmatprep.subr.bf16.mxu0 0
    %760 = vmatpush1.bf16.msra.mxu0 0
    %761 = vmatprep.subr.bf16.mxu0 0
    %762 = vmatpush1.bf16.msra.mxu0 0
    %763 = vmatprep.subr.bf16.mxu0 0
    %764 = vmatpush1.bf16.msra.mxu0 0
    %765 = vmatprep.subr.bf16.mxu0 0
    %766 = vmatpush1.bf16.msra.mxu0 0
    %767 = vmatprep.subr.bf16.mxu0 0
    %768 = vmatpush1.bf16.msra.mxu0 0
    %769 = vmatprep.mubr.bf16.mxu0 0
    %770 = vmatmul.mubr.bf16.gmra.mrb[0].mxu0 %v735
    %v771 = vpop.f32.mrb[0].mxu0
    %v772 = vadd.f32 %v191, %v771
    %v773 = vpop.f32.mrb[0].mxu0
    %v774 = vpop.f32.mrb[0].mxu0
    %v775 = vpop.f32.mrb[0].mxu0
    %776 = vdwg.mxu0
    %v777 = vadd.f32 %v729, %v772
    %v778 = vxor.u32 %v777, 2147483648
    %v779 = vmul.f32 %v778, 1.442695
    %v780 = vpow.pop %v779
    %v781 = vadd.f32 %v780, 1.0
    %v782 = vrcp.pop %v781
    %v783 = vmul.f32 1.0, %v782
    %785 = vrot.lane.b32.xlu0 %v772, 64
    %v786 = vpop.permute.xlu0 %785
    %v788 = vmul.f32 %v783, %v786
    %790 = vrot.lane.b32.xlu0 %v788, 64
    %v791 = vpop.permute.xlu0 %790
    %v793 = vadd.f32 %v729, %v791
    %v794 = vtanh.pop %v793
    %v795 = vsub.f32 1.0, %v783
    %797 = vrot.lane.b32.xlu0 %v794, 96
    %v798 = vpop.permute.xlu0 %797
    %v800 = vmul.f32 %v795, %v798
    %v801 = vmul.f32 %v783, %v727
    %v802 = vadd.f32 %v800, %v801
    %804 = vrot.lane.b32.xlu0 %v802, 96
    %v805 = vpop.permute.xlu0 %804
    %807 = vst.msk [vmem:[#allocation2] sm:$0xff] %vm92, %v805
    // Predicated region
    $region38: #{tpu_custom_call.1} parent=1 // pred_check
      %p808 = pneg %p34
    $region39: #{tpu_custom_call.1} parent=1 // pred_check_branch
      %810 = sbr.rel (%p808) target = $region41
    $region40: #{tpu_custom_call.1} parent=1 // pred_region
      %811 = vst.msk [vmem:[#allocation4] sm:$0xff] %vm92, %v805
      %v812 = vld [vmem:[%s6] sm:$0xff]
      %v813 = vld [vmem:[%s6 + $0x8] sm:$0xff]
      %v814 = vld [vmem:[%s6 + $0x10] sm:$0xff]
      %v815 = vld [vmem:[%s6 + $0x18] sm:$0xff]
      %v816 = vld [vmem:[%s7] sm:$0x1]
      %v818 = vlaneseq
      %v819 = vshrl.u32 %v818, 7
      %v820 = vsub.s32 0, %v819
      %v821 = vrot.slane %v816, %v820
      %v823 = vsel %vm92, %v805, 0
      %825 = vmatprep.subr.mxu0 0.0
      %826 = vmatpush1.msra.mxu0 %v812
      %827 = vmatprep.subr.mxu0 0.0
      %828 = vmatpush1.msra.mxu0 %v813
      %829 = vmatprep.subr.mxu0 0.0
      %830 = vmatpush1.msra.mxu0 %v814
      %831 = vmatprep.subr.mxu0 0.0
      %832 = vmatpush1.msra.mxu0 %v815
      %833 = vmatprep.subr.mxu0 0.0
      %834 = vmatpush1.msra.mxu0 0.0
      %835 = vmatprep.subr.mxu0 0.0
      %836 = vmatpush1.msra.mxu0 0.0
      %837 = vmatprep.subr.mxu0 0.0
      %838 = vmatpush1.msra.mxu0 0.0
      %839 = vmatprep.subr.mxu0 0.0
      %840 = vmatpush1.msra.mxu0 0.0
      %841 = vmatprep.subr.mxu0 0.0
      %842 = vmatpush1.msra.mxu0 0.0
      %843 = vmatprep.subr.mxu0 0.0
      %844 = vmatpush1.msra.mxu0 0.0
      %845 = vmatprep.subr.mxu0 0.0
      %846 = vmatpush1.msra.mxu0 0.0
      %847 = vmatprep.subr.mxu0 0.0
      %848 = vmatpush1.msra.mxu0 0.0
      %849 = vmatprep.subr.mxu0 0.0
      %850 = vmatpush1.msra.mxu0 0.0
      %851 = vmatprep.subr.mxu0 0.0
      %852 = vmatpush1.msra.mxu0 0.0
      %853 = vmatprep.subr.mxu0 0.0
      %854 = vmatpush1.msra.mxu0 0.0
      %855 = vmatprep.subr.mxu0 0.0
      %856 = vmatpush1.msra.mxu0 0.0
      %857 = vmatprep.subr.mxu0 0.0
      %858 = vmatpush1.msra.mxu0 0.0
      %859 = vmatprep.subr.mxu0 0.0
      %860 = vmatpush1.msra.mxu0 0.0
      %861 = vmatprep.subr.mxu0 0.0
      %862 = vmatpush1.msra.mxu0 0.0
      %863 = vmatprep.subr.mxu0 0.0
      %864 = vmatpush1.msra.mxu0 0.0
      %865 = vmatprep.subr.mxu0 0.0
      %866 = vmatpush1.msra.mxu0 0.0
      %867 = vmatprep.subr.mxu0 0.0
      %868 = vmatpush1.msra.mxu0 0.0
      %869 = vmatprep.subr.mxu0 0.0
      %870 = vmatpush1.msra.mxu0 0.0
      %871 = vmatprep.subr.mxu0 0.0
      %872 = vmatpush1.msra.mxu0 0.0
      %873 = vmatprep.subr.mxu0 0.0
      %874 = vmatpush1.msra.mxu0 0.0
      %875 = vmatprep.subr.mxu0 0.0
      %876 = vmatpush1.msra.mxu0 0.0
      %877 = vmatprep.subr.mxu0 0.0
      %878 = vmatpush1.msra.mxu0 0.0
      %879 = vmatprep.subr.mxu0 0.0
      %880 = vmatpush1.msra.mxu0 0.0
      %881 = vmatprep.subr.mxu0 0.0
      %882 = vmatpush1.msra.mxu0 0.0
      %883 = vmatprep.subr.mxu0 0.0
      %884 = vmatpush1.msra.mxu0 0.0
      %885 = vmatprep.subr.mxu0 0.0
      %886 = vmatpush1.msra.mxu0 0.0
      %887 = vmatprep.subr.mxu0 0.0
      %888 = vmatpush1.msra.mxu0 0.0
      %889 = vmatprep.mubr.f32.mxu0 0.0
      %890 = vmatmul.mubr.f32.gmra.mrb[0].mxu0 %v823
      %v891 = vpop.f32.mrb[0].mxu0
      %v892 = vadd.f32 %v821, %v891
      %v893 = vpop.f32.mrb[0].mxu0
      %894 = vdwg.mxu0
      %vm895 = vcmask 130048
      %896 = vst.msk [vmem:[#allocation6] sm:$0xff] %vm895, %v892
    $region41: #{tpu_custom_call.1} parent=1 // pred_fallthru
      _
    // Predicated region
    $region42: #{tpu_custom_call.1} parent=1 // pred_check
      _
    $region43: #{tpu_custom_call.1} parent=1 // pred_check_branch
      %898 = sbr.rel (0) target = $region45
    $region44: #{tpu_custom_call.1} parent=1 // pred_region
      %s900 = ssub.s32 128, 128
      %901 = vsyncadd [#allocation5], %s900
      %s903 = sshll.u32 [#allocation4], 4
      %s904 = int_to_ptr.vmem [resolvable:$true] %s903
      %906 = dma.vmem_to_hbm [thread:$0]  %s904, 128, %s8, [#allocation5]
    $region45: #{tpu_custom_call.1} parent=1 // pred_fallthru
      _
    // Predicated region
    $region46: #{tpu_custom_call.1} parent=1 // pred_check
      _
    $region47: #{tpu_custom_call.1} parent=1 // pred_check_branch
      %908 = sbr.rel (0) target = $region49
    $region48: #{tpu_custom_call.1} parent=1 // pred_region
      %s910 = ssub.s32 128, 128
      %911 = vsyncadd [#allocation7], %s910
      %s913 = sshll.u32 [#allocation6], 4
      %s914 = int_to_ptr.vmem [resolvable:$true] %s913
      %916 = dma.vmem_to_hbm [thread:$0]  %s914, 128, %s9, [#allocation7]
    $region49: #{tpu_custom_call.1} parent=1 // pred_fallthru
      _
    // Predicated region
    $region50: #{tpu_custom_call.1} parent=1 // pred_check
      _
    $region51: #{tpu_custom_call.1} parent=1 // pred_check_branch
      %918 = sbr.rel (0) target = $region53
    $region52: #{tpu_custom_call.1} parent=1 // pred_region
      %919 = dma.done [#allocation5], 128
    $region53: #{tpu_custom_call.1} parent=1 // pred_fallthru
      _
    // Predicated region
    $region54: #{tpu_custom_call.1} parent=1 // pred_check
      _
    $region55: #{tpu_custom_call.1} parent=1 // pred_check_branch
      %921 = sbr.rel (0) target = $region57
    $region56: #{tpu_custom_call.1} parent=1 // pred_region
      %922 = dma.done [#allocation7], 128
    $region57: #{tpu_custom_call.1} parent=1 // pred_fallthru
      _
    %923 = vsyncpa [#allocation5], 1
    %924 = vsyncpa [#allocation7], 1

</llo_original>
